<compile_context>
chip_gen: v7x
topology: tpu7x:2x2x1
jax: 0.10.0
libtpu: 0.0.40
codegen_flags: <defaults>
</compile_context>

<pallas_src>
import functools

import jax
import jax.numpy as jnp
import numpy as np
from jax.experimental import pallas as pl
from jax.experimental.pallas import tpu as pltpu


# ------------------------------ Pallas kernel ------------------------------

def _lstm_tagger_kernel(ids_ref,                       # SMEM (B, T) token ids
                        emb_ref, w_ih_ref, w_hh_ref, b_ref, w_out_ref, b_out_ref,
                        out_ref,                       # VMEM (T, Tags) block
                        x_buf, xw_buf, h_all):         # VMEM scratch
    b = pl.program_id(0)
    seq_len, hidden = h_all.shape
    vocab = emb_ref.shape[0]

    # ---- 1) Embedding lookup: dynamic-row loads from the VMEM table -------
    def gather(t, carry):
        row = jnp.clip(ids_ref[b, t], 0, vocab - 1)        # scalar from SMEM, clamped
        x_buf[pl.ds(t, 1), :] = emb_ref[pl.ds(row, 1), :]  # (1, E)
        return carry

    jax.lax.fori_loop(0, seq_len, gather, 0, unroll=True)

    # ---- 2) Input projection for every timestep in ONE MXU matmul ---------
    #      (T, E) @ (E, 4H) + b   (bias already fused: b_ih + b_hh)
    xw_buf[...] = (
        jnp.dot(x_buf[...], w_ih_ref[...], preferred_element_type=jnp.float32)
        + b_ref[...]
    )

    # ---- 3) Sequential LSTM recurrence; h/c live in the loop carry (vregs) -
    lane = jax.lax.broadcasted_iota(jnp.int32, (1, 4 * hidden), 1)
    is_g = (lane >= 2 * hidden) & (lane < 3 * hidden)      # tanh lanes (gate g)

    def step(t, carry):
        h, c = carry                                       # (1, H) each, vreg
        gates = xw_buf[pl.ds(t, 1), :] + jnp.dot(
            h, w_hh_ref[...], preferred_element_type=jnp.float32)   # (1, 4H)
        # two full-width EUP passes + one select instead of 4 narrow launches
        act = jnp.where(is_g, jnp.tanh(gates), jax.nn.sigmoid(gates))
        i = act[:, 0 * hidden:1 * hidden]
        f = act[:, 1 * hidden:2 * hidden]
        g = act[:, 2 * hidden:3 * hidden]
        o = act[:, 3 * hidden:4 * hidden]
        c_new = f * c + i * g
        h_new = o * jnp.tanh(c_new)
        h_all[pl.ds(t, 1), :] = h_new                      # row store only
        return (h_new, c_new)

    h0 = jnp.zeros((1, hidden), jnp.float32)
    c0 = jnp.zeros((1, hidden), jnp.float32)
    jax.lax.fori_loop(0, seq_len, step, (h0, c0), unroll=True)

    # ---- 4) Fused hidden2tag projection + log_softmax epilogue ------------
    tags = jnp.dot(h_all[...], w_out_ref[...],
                   preferred_element_type=jnp.float32) + b_out_ref[...]
    m = jnp.max(tags, axis=-1, keepdims=True)
    z = tags - m
    lse = jnp.log(jnp.sum(jnp.exp(z), axis=-1, keepdims=True))
    out_ref[...] = z - lse


# ------------------------------ JAX wrappers --------------------------------

def prepare_params(tp):
    """One-time (outside jit) conversion from PyTorch layouts to kernel layouts."""
    return {
        "emb": tp["emb"],                                       # (V, E)
        "w_ih_t": jnp.transpose(tp["w_ih"]),                    # (E, 4H)
        "w_hh_t": jnp.transpose(tp["w_hh"]),                    # (H, 4H)
        "b": (tp["b_ih"] + tp["b_hh"]).reshape(1, -1),          # (1, 4H)
        "w_out_t": jnp.transpose(tp["w_tag"]),                  # (H, Tags)
        "b_out": tp["b_tag"].reshape(1, -1),                    # (1, Tags)
    }


def lstm_tagger_forward_batched(sentences, kp):
    """sentences: (B, T) int32 token ids.  Returns (B, T, tagset) log-probs."""
    batch, seq_len = sentences.shape
    vocab, emb_dim = kp["emb"].shape
    hidden = kp["w_hh_t"].shape[0]
    tagset = kp["w_out_t"].shape[1]
    const = lambda b, ids: (0, 0)   # weights: same block every grid step -> no re-DMA

    grid_spec = pltpu.PrefetchScalarGridSpec(
        num_scalar_prefetch=1,                 # token ids -> SMEM, visible to kernel
        grid=(batch,),
        in_specs=[
            pl.BlockSpec((vocab, emb_dim), const),       # embedding table (V, E)
            pl.BlockSpec((emb_dim, 4 * hidden), const),  # W_ih^T          (E, 4H)
            pl.BlockSpec((hidden, 4 * hidden), const),   # W_hh^T          (H, 4H)
            pl.BlockSpec((1, 4 * hidden), const),        # fused bias      (1, 4H)
            pl.BlockSpec((hidden, tagset), const),       # hidden2tag W^T  (H, Tags)
            pl.BlockSpec((1, tagset), const),            # hidden2tag bias (1, Tags)
        ],
        out_specs=pl.BlockSpec((None, seq_len, tagset), lambda b, ids: (b, 0, 0)),
        scratch_shapes=[
            pltpu.VMEM((seq_len, emb_dim), jnp.float32),      # gathered embeddings
            pltpu.VMEM((seq_len, 4 * hidden), jnp.float32),   # x @ W_ih^T + b
            pltpu.VMEM((seq_len, hidden), jnp.float32),       # all hidden states
        ],
    )

    return pl.pallas_call(
        _lstm_tagger_kernel,
        out_shape=jax.ShapeDtypeStruct((batch, seq_len, tagset), jnp.float32),
        grid_spec=grid_spec,
        compiler_params=pltpu.CompilerParams(
            dimension_semantics=("parallel",),   # v7x: shard sentences over 2 TCs
        ),
    )(sentences, kp["emb"], kp["w_ih_t"], kp["w_hh_t"], kp["b"],
      kp["w_out_t"], kp["b_out"])


def lstm_tagger_forward(sentence, kp):
    """Single-sentence API matching the PyTorch module: (T,) -> (T, tagset)."""
    return lstm_tagger_forward_batched(sentence[None, :], kp)[0]


# ------------------------- pure-JAX reference check -------------------------

def reference_forward(sentence, tp):
    emb = tp["emb"][sentence]                    # (T, E)
    H = tp["w_hh"].shape[1]
    T = sentence.shape[0]
    h = jnp.zeros((H,), jnp.float32)
    c = jnp.zeros((H,), jnp.float32)
    hs = []
    for t in range(T):
        gates = tp["w_ih"] @ emb[t] + tp["b_ih"] + tp["w_hh"] @ h + tp["b_hh"]
        i = jax.nn.sigmoid(gates[0 * H:1 * H])
        f = jax.nn.sigmoid(gates[1 * H:2 * H])
        g = jnp.tanh(gates[2 * H:3 * H])
        o = jax.nn.sigmoid(gates[3 * H:4 * H])
        c = f * c + i * g
        h = o * jnp.tanh(c)
        hs.append(h)
    hcat = jnp.stack(hs)                         # (T, H)
    tags = hcat @ tp["w_tag"].T + tp["b_tag"]
    return jax.nn.log_softmax(tags, axis=1)


# ----------------------------------- main ------------------------------------

if __name__ == "__main__":
    vocab_size, embedding_dim, hidden_dim, tagset_size = 20, 32, 32, 8
    batch, seq_len = 2, 8
    scale = 0.1

    key = jax.random.PRNGKey(0)
    k = jax.random.split(key, 8)
    torch_params = {
        "emb":  jax.random.normal(k[0], (vocab_size, embedding_dim), jnp.float32) * scale,
        "w_ih": jax.random.normal(k[1], (4 * hidden_dim, embedding_dim), jnp.float32) * scale,
        "w_hh": jax.random.normal(k[2], (4 * hidden_dim, hidden_dim), jnp.float32) * scale,
        "b_ih": jax.random.normal(k[3], (4 * hidden_dim,), jnp.float32) * scale,
        "b_hh": jax.random.normal(k[4], (4 * hidden_dim,), jnp.float32) * scale,
        "w_tag": jax.random.normal(k[5], (tagset_size, hidden_dim), jnp.float32) * scale,
        "b_tag": jax.random.normal(k[6], (tagset_size,), jnp.float32) * scale,
    }
    sentences = jax.random.randint(k[7], (batch, seq_len), 0, vocab_size, dtype=jnp.int32)

    kernel_params = prepare_params(torch_params)   # pre-transposed once, outside jit

    out = jax.jit(lstm_tagger_forward_batched)(sentences, kernel_params)
    out = jax.block_until_ready(out)
    assert out.shape == (batch, seq_len, tagset_size), out.shape
    assert bool(jnp.all(jnp.isfinite(out)))

    # per-sentence reference (mirrors the single-sentence PyTorch forward)
    for bi in range(batch):
        ref = jax.block_until_ready(reference_forward(sentences[bi], torch_params))
        np.testing.assert_allclose(np.asarray(out[bi]), np.asarray(ref),
                                   atol=1e-4, rtol=1e-4)

    # single-sentence API (exact PyTorch module signature) also works
    single = jax.block_until_ready(jax.jit(lstm_tagger_forward)(sentences[0], kernel_params))
    np.testing.assert_allclose(np.asarray(single), np.asarray(out[0]), atol=1e-6, rtol=1e-6)

    print("KERNEL_OK")
</pallas_src>

<mosaic_0001>
module attributes {stable_mosaic.version = 11 : i64} {
  func.func @_lstm_tagger_kernel(%arg0: i32, %arg1: memref<2x8xi32, #tpu.memory_space<smem>>, %arg2: memref<20x32xf32, #tpu.memory_space<vmem>>, %arg3: memref<32x128xf32, #tpu.memory_space<vmem>>, %arg4: memref<32x128xf32, #tpu.memory_space<vmem>>, %arg5: memref<1x128xf32, #tpu.memory_space<vmem>>, %arg6: memref<32x8xf32, #tpu.memory_space<vmem>>, %arg7: memref<1x8xf32, #tpu.memory_space<vmem>>, %arg8: memref<1x8x8xf32, #tpu.memory_space<vmem>>, %arg9: memref<8x32xf32, #tpu.memory_space<vmem>>, %arg10: memref<8x128xf32, #tpu.memory_space<vmem>>, %arg11: memref<8x32xf32, #tpu.memory_space<vmem>>) attributes {dimension_semantics = [#tpu.dimension_semantics<parallel>], iteration_bounds = array<i64: 2>, scalar_prefetch = 1 : i64, scratch_operands = 3 : i64, tpu.core_type = #tpu.core_type<tc>, window_params = [{pipeline_mode = #tpu.pipeline_mode<synchronous>, transform_indices = @transform_0, window_bounds = array<i64: 20, 32>}, {pipeline_mode = #tpu.pipeline_mode<synchronous>, transform_indices = @transform_1, window_bounds = array<i64: 32, 128>}, {pipeline_mode = #tpu.pipeline_mode<synchronous>, transform_indices = @transform_2, window_bounds = array<i64: 32, 128>}, {pipeline_mode = #tpu.pipeline_mode<synchronous>, transform_indices = @transform_3, window_bounds = array<i64: 1, 128>}, {pipeline_mode = #tpu.pipeline_mode<synchronous>, transform_indices = @transform_4, window_bounds = array<i64: 32, 8>}, {pipeline_mode = #tpu.pipeline_mode<synchronous>, transform_indices = @transform_5, window_bounds = array<i64: 1, 8>}, {transform_indices = @transform_6, window_bounds = array<i64: 1, 8, 8>}]} {
    %c0_i32 = arith.constant 0 : i32
    %0 = arith.index_cast %arg0 : i32 to index
    %1 = arith.index_cast %c0_i32 : i32 to index
    %2 = memref.load %arg1[%0, %1] : memref<2x8xi32, #tpu.memory_space<smem>>
    %c0_i32_0 = arith.constant 0 : i32
    %c19_i32 = arith.constant 19 : i32
    %3 = arith.maxsi %c0_i32_0, %2 : i32
    %4 = arith.minsi %c19_i32, %3 : i32
    %5 = arith.index_cast %4 : i32 to index
    %c0 = arith.constant 0 : index
    %6 = vector.load %arg2[%5, %c0] : memref<20x32xf32, #tpu.memory_space<vmem>>, vector<1x32xf32>
    %7 = arith.index_cast %c0_i32 : i32 to index
    %c0_1 = arith.constant 0 : index
    %8 = vector.load %arg9[%7, %c0_1] : memref<8x32xf32, #tpu.memory_space<vmem>>, vector<1x32xf32>
    tpu.vector_store %arg9[%7, %c0_1], %6 {strides = array<i32>} : memref<8x32xf32, #tpu.memory_space<vmem>>, vector<1x32xf32>,
    %c1_i32 = arith.constant 1 : i32
    %9 = arith.index_cast %arg0 : i32 to index
    %10 = arith.index_cast %c1_i32 : i32 to index
    %11 = memref.load %arg1[%9, %10] : memref<2x8xi32, #tpu.memory_space<smem>>
    %c0_i32_2 = arith.constant 0 : i32
    %c19_i32_3 = arith.constant 19 : i32
    %12 = arith.maxsi %c0_i32_2, %11 : i32
    %13 = arith.minsi %c19_i32_3, %12 : i32
    %14 = arith.index_cast %13 : i32 to index
    %c0_4 = arith.constant 0 : index
    %15 = vector.load %arg2[%14, %c0_4] : memref<20x32xf32, #tpu.memory_space<vmem>>, vector<1x32xf32>
    %16 = arith.index_cast %c1_i32 : i32 to index
    %c0_5 = arith.constant 0 : index
    %17 = vector.load %arg9[%16, %c0_5] : memref<8x32xf32, #tpu.memory_space<vmem>>, vector<1x32xf32>
    tpu.vector_store %arg9[%16, %c0_5], %15 {strides = array<i32>} : memref<8x32xf32, #tpu.memory_space<vmem>>, vector<1x32xf32>,
    %c2_i32 = arith.constant 2 : i32
    %18 = arith.index_cast %arg0 : i32 to index
    %19 = arith.index_cast %c2_i32 : i32 to index
    %20 = memref.load %arg1[%18, %19] : memref<2x8xi32, #tpu.memory_space<smem>>
    %c0_i32_6 = arith.constant 0 : i32
    %c19_i32_7 = arith.constant 19 : i32
    %21 = arith.maxsi %c0_i32_6, %20 : i32
    %22 = arith.minsi %c19_i32_7, %21 : i32
    %23 = arith.index_cast %22 : i32 to index
    %c0_8 = arith.constant 0 : index
    %24 = vector.load %arg2[%23, %c0_8] : memref<20x32xf32, #tpu.memory_space<vmem>>, vector<1x32xf32>
    %25 = arith.index_cast %c2_i32 : i32 to index
    %c0_9 = arith.constant 0 : index
    %26 = vector.load %arg9[%25, %c0_9] : memref<8x32xf32, #tpu.memory_space<vmem>>, vector<1x32xf32>
    tpu.vector_store %arg9[%25, %c0_9], %24 {strides = array<i32>} : memref<8x32xf32, #tpu.memory_space<vmem>>, vector<1x32xf32>,
    %c3_i32 = arith.constant 3 : i32
    %27 = arith.index_cast %arg0 : i32 to index
    %28 = arith.index_cast %c3_i32 : i32 to index
    %29 = memref.load %arg1[%27, %28] : memref<2x8xi32, #tpu.memory_space<smem>>
    %c0_i32_10 = arith.constant 0 : i32
    %c19_i32_11 = arith.constant 19 : i32
    %30 = arith.maxsi %c0_i32_10, %29 : i32
    %31 = arith.minsi %c19_i32_11, %30 : i32
    %32 = arith.index_cast %31 : i32 to index
    %c0_12 = arith.constant 0 : index
    %33 = vector.load %arg2[%32, %c0_12] : memref<20x32xf32, #tpu.memory_space<vmem>>, vector<1x32xf32>
    %34 = arith.index_cast %c3_i32 : i32 to index
    %c0_13 = arith.constant 0 : index
    %35 = vector.load %arg9[%34, %c0_13] : memref<8x32xf32, #tpu.memory_space<vmem>>, vector<1x32xf32>
    tpu.vector_store %arg9[%34, %c0_13], %33 {strides = array<i32>} : memref<8x32xf32, #tpu.memory_space<vmem>>, vector<1x32xf32>,
    %c4_i32 = arith.constant 4 : i32
    %36 = arith.index_cast %arg0 : i32 to index
    %37 = arith.index_cast %c4_i32 : i32 to index
    %38 = memref.load %arg1[%36, %37] : memref<2x8xi32, #tpu.memory_space<smem>>
    %c0_i32_14 = arith.constant 0 : i32
    %c19_i32_15 = arith.constant 19 : i32
    %39 = arith.maxsi %c0_i32_14, %38 : i32
    %40 = arith.minsi %c19_i32_15, %39 : i32
    %41 = arith.index_cast %40 : i32 to index
    %c0_16 = arith.constant 0 : index
    %42 = vector.load %arg2[%41, %c0_16] : memref<20x32xf32, #tpu.memory_space<vmem>>, vector<1x32xf32>
    %43 = arith.index_cast %c4_i32 : i32 to index
    %c0_17 = arith.constant 0 : index
    %44 = vector.load %arg9[%43, %c0_17] : memref<8x32xf32, #tpu.memory_space<vmem>>, vector<1x32xf32>
    tpu.vector_store %arg9[%43, %c0_17], %42 {strides = array<i32>} : memref<8x32xf32, #tpu.memory_space<vmem>>, vector<1x32xf32>,
    %c5_i32 = arith.constant 5 : i32
    %45 = arith.index_cast %arg0 : i32 to index
    %46 = arith.index_cast %c5_i32 : i32 to index
    %47 = memref.load %arg1[%45, %46] : memref<2x8xi32, #tpu.memory_space<smem>>
    %c0_i32_18 = arith.constant 0 : i32
    %c19_i32_19 = arith.constant 19 : i32
    %48 = arith.maxsi %c0_i32_18, %47 : i32
    %49 = arith.minsi %c19_i32_19, %48 : i32
    %50 = arith.index_cast %49 : i32 to index
    %c0_20 = arith.constant 0 : index
    %51 = vector.load %arg2[%50, %c0_20] : memref<20x32xf32, #tpu.memory_space<vmem>>, vector<1x32xf32>
    %52 = arith.index_cast %c5_i32 : i32 to index
    %c0_21 = arith.constant 0 : index
    %53 = vector.load %arg9[%52, %c0_21] : memref<8x32xf32, #tpu.memory_space<vmem>>, vector<1x32xf32>
    tpu.vector_store %arg9[%52, %c0_21], %51 {strides = array<i32>} : memref<8x32xf32, #tpu.memory_space<vmem>>, vector<1x32xf32>,
    %c6_i32 = arith.constant 6 : i32
    %54 = arith.index_cast %arg0 : i32 to index
    %55 = arith.index_cast %c6_i32 : i32 to index
    %56 = memref.load %arg1[%54, %55] : memref<2x8xi32, #tpu.memory_space<smem>>
    %c0_i32_22 = arith.constant 0 : i32
    %c19_i32_23 = arith.constant 19 : i32
    %57 = arith.maxsi %c0_i32_22, %56 : i32
    %58 = arith.minsi %c19_i32_23, %57 : i32
    %59 = arith.index_cast %58 : i32 to index
    %c0_24 = arith.constant 0 : index
    %60 = vector.load %arg2[%59, %c0_24] : memref<20x32xf32, #tpu.memory_space<vmem>>, vector<1x32xf32>
    %61 = arith.index_cast %c6_i32 : i32 to index
    %c0_25 = arith.constant 0 : index
    %62 = vector.load %arg9[%61, %c0_25] : memref<8x32xf32, #tpu.memory_space<vmem>>, vector<1x32xf32>
    tpu.vector_store %arg9[%61, %c0_25], %60 {strides = array<i32>} : memref<8x32xf32, #tpu.memory_space<vmem>>, vector<1x32xf32>,
    %c7_i32 = arith.constant 7 : i32
    %63 = arith.index_cast %arg0 : i32 to index
    %64 = arith.index_cast %c7_i32 : i32 to index
    %65 = memref.load %arg1[%63, %64] : memref<2x8xi32, #tpu.memory_space<smem>>
    %c0_i32_26 = arith.constant 0 : i32
    %c19_i32_27 = arith.constant 19 : i32
    %66 = arith.maxsi %c0_i32_26, %65 : i32
    %67 = arith.minsi %c19_i32_27, %66 : i32
    %68 = arith.index_cast %67 : i32 to index
    %c0_28 = arith.constant 0 : index
    %69 = vector.load %arg2[%68, %c0_28] : memref<20x32xf32, #tpu.memory_space<vmem>>, vector<1x32xf32>
    %70 = arith.index_cast %c7_i32 : i32 to index
    %c0_29 = arith.constant 0 : index
    %71 = vector.load %arg9[%70, %c0_29] : memref<8x32xf32, #tpu.memory_space<vmem>>, vector<1x32xf32>
    tpu.vector_store %arg9[%70, %c0_29], %69 {strides = array<i32>} : memref<8x32xf32, #tpu.memory_space<vmem>>, vector<1x32xf32>,
    %c8_i32 = arith.constant 8 : i32
    %c0_30 = arith.constant 0 : index
    %c0_31 = arith.constant 0 : index
    %72 = vector.load %arg9[%c0_30, %c0_31] : memref<8x32xf32, #tpu.memory_space<vmem>>, vector<8x32xf32>
    %c0_32 = arith.constant 0 : index
    %c0_33 = arith.constant 0 : index
    %73 = vector.load %arg3[%c0_32, %c0_33] : memref<32x128xf32, #tpu.memory_space<vmem>>, vector<32x128xf32>
    %cst = arith.constant dense<0.000000e+00> : vector<8x128xf32>
    %74 = tpu.matmul %72, %73, %cst {dimension_numbers = #tpu.dot_dimension_numbers<[1], [0], [0], [1], [0, 0, 1, 1], [], []>} : vector<8x32xf32>, vector<32x128xf32>, vector<8x128xf32> -> vector<8x128xf32>
    %c0_34 = arith.constant 0 : index
    %c0_35 = arith.constant 0 : index
    %75 = vector.load %arg5[%c0_34, %c0_35] : memref<1x128xf32, #tpu.memory_space<vmem>>, vector<1x128xf32>
    %76 = vector.broadcast %75 : vector<1x128xf32> to vector<8x128xf32>
    %77 = arith.addf %74, %76 : vector<8x128xf32>
    %c0_36 = arith.constant 0 : index
    %c0_37 = arith.constant 0 : index
    %78 = vector.load %arg10[%c0_36, %c0_37] : memref<8x128xf32, #tpu.memory_space<vmem>>, vector<8x128xf32>
    tpu.vector_store %arg10[%c0_36, %c0_37], %77 {strides = array<i32>} : memref<8x128xf32, #tpu.memory_space<vmem>>, vector<8x128xf32>,
    %79 = tpu.iota {dimensions = array<i32: 1>} : vector<1x128xi32>
    %c64_i32 = arith.constant 64 : i32
    %80 = vector.broadcast %c64_i32 : i32 to vector<1x128xi32>
    %81 = arith.cmpi sge, %79, %80 : vector<1x128xi32>
    %c96_i32 = arith.constant 96 : i32
    %82 = vector.broadcast %c96_i32 : i32 to vector<1x128xi32>
    %83 = arith.cmpi slt, %79, %82 : vector<1x128xi32>
    %84 = arith.andi %81, %83 : vector<1x128xi1>
    %cst_38 = arith.constant 0.000000e+00 : f32
    %85 = vector.broadcast %cst_38 : f32 to vector<1x32xf32>
    %cst_39 = arith.constant 0.000000e+00 : f32
    %86 = vector.broadcast %cst_39 : f32 to vector<1x32xf32>
    %c0_i32_40 = arith.constant 0 : i32
    %87 = arith.index_cast %c0_i32_40 : i32 to index
    %c0_41 = arith.constant 0 : index
    %88 = vector.load %arg10[%87, %c0_41] : memref<8x128xf32, #tpu.memory_space<vmem>>, vector<1x128xf32>
    %c0_42 = arith.constant 0 : index
    %c0_43 = arith.constant 0 : index
    %89 = vector.load %arg4[%c0_42, %c0_43] : memref<32x128xf32, #tpu.memory_space<vmem>>, vector<32x128xf32>
    %cst_44 = arith.constant dense<0.000000e+00> : vector<1x128xf32>
    %90 = tpu.matmul %85, %89, %cst_44 {dimension_numbers = #tpu.dot_dimension_numbers<[1], [0], [0], [1], [0, 0, 1, 1], [], []>} : vector<1x32xf32>, vector<32x128xf32>, vector<1x128xf32> -> vector<1x128xf32>
    %91 = arith.addf %88, %90 : vector<1x128xf32>
    %92 = math.tanh %91 : vector<1x128xf32>
    %93 = arith.negf %91 : vector<1x128xf32>
    %94 = math.exp %93 : vector<1x128xf32>
    %cst_45 = arith.constant 1.000000e+00 : f32
    %95 = vector.broadcast %cst_45 : f32 to vector<1x128xf32>
    %96 = arith.addf %95, %94 : vector<1x128xf32>
    %97 = arith.divf %95, %96 : vector<1x128xf32>
    %98 = arith.select %84, %92, %97 : vector<1x128xi1>, vector<1x128xf32>
    %99 = vector.extract_strided_slice %98 {offsets = [0, 0], sizes = [1, 32], strides = [1, 1]} : vector<1x128xf32> to vector<1x32xf32>
    %100 = vector.extract_strided_slice %98 {offsets = [0, 32], sizes = [1, 32], strides = [1, 1]} : vector<1x128xf32> to vector<1x32xf32>
    %101 = vector.extract_strided_slice %98 {offsets = [0, 64], sizes = [1, 32], strides = [1, 1]} : vector<1x128xf32> to vector<1x32xf32>
    %102 = vector.extract_strided_slice %98 {offsets = [0, 96], sizes = [1, 32], strides = [1, 1]} : vector<1x128xf32> to vector<1x32xf32>
    %103 = arith.mulf %100, %86 : vector<1x32xf32>
    %104 = arith.mulf %99, %101 : vector<1x32xf32>
    %105 = arith.addf %103, %104 : vector<1x32xf32>
    %106 = math.tanh %105 : vector<1x32xf32>
    %107 = arith.mulf %102, %106 : vector<1x32xf32>
    %108 = arith.index_cast %c0_i32_40 : i32 to index
    %c0_46 = arith.constant 0 : index
    %109 = vector.load %arg11[%108, %c0_46] : memref<8x32xf32, #tpu.memory_space<vmem>>, vector<1x32xf32>
    tpu.vector_store %arg11[%108, %c0_46], %107 {strides = array<i32>} : memref<8x32xf32, #tpu.memory_space<vmem>>, vector<1x32xf32>,
    %c1_i32_47 = arith.constant 1 : i32
    %110 = arith.index_cast %c1_i32_47 : i32 to index
    %c0_48 = arith.constant 0 : index
    %111 = vector.load %arg10[%110, %c0_48] : memref<8x128xf32, #tpu.memory_space<vmem>>, vector<1x128xf32>
    %c0_49 = arith.constant 0 : index
    %c0_50 = arith.constant 0 : index
    %112 = vector.load %arg4[%c0_49, %c0_50] : memref<32x128xf32, #tpu.memory_space<vmem>>, vector<32x128xf32>
    %cst_51 = arith.constant dense<0.000000e+00> : vector<1x128xf32>
    %113 = tpu.matmul %107, %112, %cst_51 {dimension_numbers = #tpu.dot_dimension_numbers<[1], [0], [0], [1], [0, 0, 1, 1], [], []>} : vector<1x32xf32>, vector<32x128xf32>, vector<1x128xf32> -> vector<1x128xf32>
    %114 = arith.addf %111, %113 : vector<1x128xf32>
    %115 = math.tanh %114 : vector<1x128xf32>
    %116 = arith.negf %114 : vector<1x128xf32>
    %117 = math.exp %116 : vector<1x128xf32>
    %cst_52 = arith.constant 1.000000e+00 : f32
    %118 = vector.broadcast %cst_52 : f32 to vector<1x128xf32>
    %119 = arith.addf %118, %117 : vector<1x128xf32>
    %120 = arith.divf %118, %119 : vector<1x128xf32>
    %121 = arith.select %84, %115, %120 : vector<1x128xi1>, vector<1x128xf32>
    %122 = vector.extract_strided_slice %121 {offsets = [0, 0], sizes = [1, 32], strides = [1, 1]} : vector<1x128xf32> to vector<1x32xf32>
    %123 = vector.extract_strided_slice %121 {offsets = [0, 32], sizes = [1, 32], strides = [1, 1]} : vector<1x128xf32> to vector<1x32xf32>
    %124 = vector.extract_strided_slice %121 {offsets = [0, 64], sizes = [1, 32], strides = [1, 1]} : vector<1x128xf32> to vector<1x32xf32>
    %125 = vector.extract_strided_slice %121 {offsets = [0, 96], sizes = [1, 32], strides = [1, 1]} : vector<1x128xf32> to vector<1x32xf32>
    %126 = arith.mulf %123, %105 : vector<1x32xf32>
    %127 = arith.mulf %122, %124 : vector<1x32xf32>
    %128 = arith.addf %126, %127 : vector<1x32xf32>
    %129 = math.tanh %128 : vector<1x32xf32>
    %130 = arith.mulf %125, %129 : vector<1x32xf32>
    %131 = arith.index_cast %c1_i32_47 : i32 to index
    %c0_53 = arith.constant 0 : index
    %132 = vector.load %arg11[%131, %c0_53] : memref<8x32xf32, #tpu.memory_space<vmem>>, vector<1x32xf32>
    tpu.vector_store %arg11[%131, %c0_53], %130 {strides = array<i32>} : memref<8x32xf32, #tpu.memory_space<vmem>>, vector<1x32xf32>,
    %c2_i32_54 = arith.constant 2 : i32
    %133 = arith.index_cast %c2_i32_54 : i32 to index
    %c0_55 = arith.constant 0 : index
    %134 = vector.load %arg10[%133, %c0_55] : memref<8x128xf32, #tpu.memory_space<vmem>>, vector<1x128xf32>
    %c0_56 = arith.constant 0 : index
    %c0_57 = arith.constant 0 : index
    %135 = vector.load %arg4[%c0_56, %c0_57] : memref<32x128xf32, #tpu.memory_space<vmem>>, vector<32x128xf32>
    %cst_58 = arith.constant dense<0.000000e+00> : vector<1x128xf32>
    %136 = tpu.matmul %130, %135, %cst_58 {dimension_numbers = #tpu.dot_dimension_numbers<[1], [0], [0], [1], [0, 0, 1, 1], [], []>} : vector<1x32xf32>, vector<32x128xf32>, vector<1x128xf32> -> vector<1x128xf32>
    %137 = arith.addf %134, %136 : vector<1x128xf32>
    %138 = math.tanh %137 : vector<1x128xf32>
    %139 = arith.negf %137 : vector<1x128xf32>
    %140 = math.exp %139 : vector<1x128xf32>
    %cst_59 = arith.constant 1.000000e+00 : f32
    %141 = vector.broadcast %cst_59 : f32 to vector<1x128xf32>
    %142 = arith.addf %141, %140 : vector<1x128xf32>
    %143 = arith.divf %141, %142 : vector<1x128xf32>
    %144 = arith.select %84, %138, %143 : vector<1x128xi1>, vector<1x128xf32>
    %145 = vector.extract_strided_slice %144 {offsets = [0, 0], sizes = [1, 32], strides = [1, 1]} : vector<1x128xf32> to vector<1x32xf32>
    %146 = vector.extract_strided_slice %144 {offsets = [0, 32], sizes = [1, 32], strides = [1, 1]} : vector<1x128xf32> to vector<1x32xf32>
    %147 = vector.extract_strided_slice %144 {offsets = [0, 64], sizes = [1, 32], strides = [1, 1]} : vector<1x128xf32> to vector<1x32xf32>
    %148 = vector.extract_strided_slice %144 {offsets = [0, 96], sizes = [1, 32], strides = [1, 1]} : vector<1x128xf32> to vector<1x32xf32>
    %149 = arith.mulf %146, %128 : vector<1x32xf32>
    %150 = arith.mulf %145, %147 : vector<1x32xf32>
    %151 = arith.addf %149, %150 : vector<1x32xf32>
    %152 = math.tanh %151 : vector<1x32xf32>
    %153 = arith.mulf %148, %152 : vector<1x32xf32>
    %154 = arith.index_cast %c2_i32_54 : i32 to index
    %c0_60 = arith.constant 0 : index
    %155 = vector.load %arg11[%154, %c0_60] : memref<8x32xf32, #tpu.memory_space<vmem>>, vector<1x32xf32>
    tpu.vector_store %arg11[%154, %c0_60], %153 {strides = array<i32>} : memref<8x32xf32, #tpu.memory_space<vmem>>, vector<1x32xf32>,
    %c3_i32_61 = arith.constant 3 : i32
    %156 = arith.index_cast %c3_i32_61 : i32 to index
    %c0_62 = arith.constant 0 : index
    %157 = vector.load %arg10[%156, %c0_62] : memref<8x128xf32, #tpu.memory_space<vmem>>, vector<1x128xf32>
    %c0_63 = arith.constant 0 : index
    %c0_64 = arith.constant 0 : index
    %158 = vector.load %arg4[%c0_63, %c0_64] : memref<32x128xf32, #tpu.memory_space<vmem>>, vector<32x128xf32>
    %cst_65 = arith.constant dense<0.000000e+00> : vector<1x128xf32>
    %159 = tpu.matmul %153, %158, %cst_65 {dimension_numbers = #tpu.dot_dimension_numbers<[1], [0], [0], [1], [0, 0, 1, 1], [], []>} : vector<1x32xf32>, vector<32x128xf32>, vector<1x128xf32> -> vector<1x128xf32>
    %160 = arith.addf %157, %159 : vector<1x128xf32>
    %161 = math.tanh %160 : vector<1x128xf32>
    %162 = arith.negf %160 : vector<1x128xf32>
    %163 = math.exp %162 : vector<1x128xf32>
    %cst_66 = arith.constant 1.000000e+00 : f32
    %164 = vector.broadcast %cst_66 : f32 to vector<1x128xf32>
    %165 = arith.addf %164, %163 : vector<1x128xf32>
    %166 = arith.divf %164, %165 : vector<1x128xf32>
    %167 = arith.select %84, %161, %166 : vector<1x128xi1>, vector<1x128xf32>
    %168 = vector.extract_strided_slice %167 {offsets = [0, 0], sizes = [1, 32], strides = [1, 1]} : vector<1x128xf32> to vector<1x32xf32>
    %169 = vector.extract_strided_slice %167 {offsets = [0, 32], sizes = [1, 32], strides = [1, 1]} : vector<1x128xf32> to vector<1x32xf32>
    %170 = vector.extract_strided_slice %167 {offsets = [0, 64], sizes = [1, 32], strides = [1, 1]} : vector<1x128xf32> to vector<1x32xf32>
    %171 = vector.extract_strided_slice %167 {offsets = [0, 96], sizes = [1, 32], strides = [1, 1]} : vector<1x128xf32> to vector<1x32xf32>
    %172 = arith.mulf %169, %151 : vector<1x32xf32>
    %173 = arith.mulf %168, %170 : vector<1x32xf32>
    %174 = arith.addf %172, %173 : vector<1x32xf32>
    %175 = math.tanh %174 : vector<1x32xf32>
    %176 = arith.mulf %171, %175 : vector<1x32xf32>
    %177 = arith.index_cast %c3_i32_61 : i32 to index
    %c0_67 = arith.constant 0 : index
    %178 = vector.load %arg11[%177, %c0_67] : memref<8x32xf32, #tpu.memory_space<vmem>>, vector<1x32xf32>
    tpu.vector_store %arg11[%177, %c0_67], %176 {strides = array<i32>} : memref<8x32xf32, #tpu.memory_space<vmem>>, vector<1x32xf32>,
    %c4_i32_68 = arith.constant 4 : i32
    %179 = arith.index_cast %c4_i32_68 : i32 to index
    %c0_69 = arith.constant 0 : index
    %180 = vector.load %arg10[%179, %c0_69] : memref<8x128xf32, #tpu.memory_space<vmem>>, vector<1x128xf32>
    %c0_70 = arith.constant 0 : index
    %c0_71 = arith.constant 0 : index
    %181 = vector.load %arg4[%c0_70, %c0_71] : memref<32x128xf32, #tpu.memory_space<vmem>>, vector<32x128xf32>
    %cst_72 = arith.constant dense<0.000000e+00> : vector<1x128xf32>
    %182 = tpu.matmul %176, %181, %cst_72 {dimension_numbers = #tpu.dot_dimension_numbers<[1], [0], [0], [1], [0, 0, 1, 1], [], []>} : vector<1x32xf32>, vector<32x128xf32>, vector<1x128xf32> -> vector<1x128xf32>
    %183 = arith.addf %180, %182 : vector<1x128xf32>
    %184 = math.tanh %183 : vector<1x128xf32>
    %185 = arith.negf %183 : vector<1x128xf32>
    %186 = math.exp %185 : vector<1x128xf32>
    %cst_73 = arith.constant 1.000000e+00 : f32
    %187 = vector.broadcast %cst_73 : f32 to vector<1x128xf32>
    %188 = arith.addf %187, %186 : vector<1x128xf32>
    %189 = arith.divf %187, %188 : vector<1x128xf32>
    %190 = arith.select %84, %184, %189 : vector<1x128xi1>, vector<1x128xf32>
    %191 = vector.extract_strided_slice %190 {offsets = [0, 0], sizes = [1, 32], strides = [1, 1]} : vector<1x128xf32> to vector<1x32xf32>
    %192 = vector.extract_strided_slice %190 {offsets = [0, 32], sizes = [1, 32], strides = [1, 1]} : vector<1x128xf32> to vector<1x32xf32>
    %193 = vector.extract_strided_slice %190 {offsets = [0, 64], sizes = [1, 32], strides = [1, 1]} : vector<1x128xf32> to vector<1x32xf32>
    %194 = vector.extract_strided_slice %190 {offsets = [0, 96], sizes = [1, 32], strides = [1, 1]} : vector<1x128xf32> to vector<1x32xf32>
    %195 = arith.mulf %192, %174 : vector<1x32xf32>
    %196 = arith.mulf %191, %193 : vector<1x32xf32>
    %197 = arith.addf %195, %196 : vector<1x32xf32>
    %198 = math.tanh %197 : vector<1x32xf32>
    %199 = arith.mulf %194, %198 : vector<1x32xf32>
    %200 = arith.index_cast %c4_i32_68 : i32 to index
    %c0_74 = arith.constant 0 : index
    %201 = vector.load %arg11[%200, %c0_74] : memref<8x32xf32, #tpu.memory_space<vmem>>, vector<1x32xf32>
    tpu.vector_store %arg11[%200, %c0_74], %199 {strides = array<i32>} : memref<8x32xf32, #tpu.memory_space<vmem>>, vector<1x32xf32>,
    %c5_i32_75 = arith.constant 5 : i32
    %202 = arith.index_cast %c5_i32_75 : i32 to index
    %c0_76 = arith.constant 0 : index
    %203 = vector.load %arg10[%202, %c0_76] : memref<8x128xf32, #tpu.memory_space<vmem>>, vector<1x128xf32>
    %c0_77 = arith.constant 0 : index
    %c0_78 = arith.constant 0 : index
    %204 = vector.load %arg4[%c0_77, %c0_78] : memref<32x128xf32, #tpu.memory_space<vmem>>, vector<32x128xf32>
    %cst_79 = arith.constant dense<0.000000e+00> : vector<1x128xf32>
    %205 = tpu.matmul %199, %204, %cst_79 {dimension_numbers = #tpu.dot_dimension_numbers<[1], [0], [0], [1], [0, 0, 1, 1], [], []>} : vector<1x32xf32>, vector<32x128xf32>, vector<1x128xf32> -> vector<1x128xf32>
    %206 = arith.addf %203, %205 : vector<1x128xf32>
    %207 = math.tanh %206 : vector<1x128xf32>
    %208 = arith.negf %206 : vector<1x128xf32>
    %209 = math.exp %208 : vector<1x128xf32>
    %cst_80 = arith.constant 1.000000e+00 : f32
    %210 = vector.broadcast %cst_80 : f32 to vector<1x128xf32>
    %211 = arith.addf %210, %209 : vector<1x128xf32>
    %212 = arith.divf %210, %211 : vector<1x128xf32>
    %213 = arith.select %84, %207, %212 : vector<1x128xi1>, vector<1x128xf32>
    %214 = vector.extract_strided_slice %213 {offsets = [0, 0], sizes = [1, 32], strides = [1, 1]} : vector<1x128xf32> to vector<1x32xf32>
    %215 = vector.extract_strided_slice %213 {offsets = [0, 32], sizes = [1, 32], strides = [1, 1]} : vector<1x128xf32> to vector<1x32xf32>
    %216 = vector.extract_strided_slice %213 {offsets = [0, 64], sizes = [1, 32], strides = [1, 1]} : vector<1x128xf32> to vector<1x32xf32>
    %217 = vector.extract_strided_slice %213 {offsets = [0, 96], sizes = [1, 32], strides = [1, 1]} : vector<1x128xf32> to vector<1x32xf32>
    %218 = arith.mulf %215, %197 : vector<1x32xf32>
    %219 = arith.mulf %214, %216 : vector<1x32xf32>
    %220 = arith.addf %218, %219 : vector<1x32xf32>
    %221 = math.tanh %220 : vector<1x32xf32>
    %222 = arith.mulf %217, %221 : vector<1x32xf32>
    %223 = arith.index_cast %c5_i32_75 : i32 to index
    %c0_81 = arith.constant 0 : index
    %224 = vector.load %arg11[%223, %c0_81] : memref<8x32xf32, #tpu.memory_space<vmem>>, vector<1x32xf32>
    tpu.vector_store %arg11[%223, %c0_81], %222 {strides = array<i32>} : memref<8x32xf32, #tpu.memory_space<vmem>>, vector<1x32xf32>,
    %c6_i32_82 = arith.constant 6 : i32
    %225 = arith.index_cast %c6_i32_82 : i32 to index
    %c0_83 = arith.constant 0 : index
    %226 = vector.load %arg10[%225, %c0_83] : memref<8x128xf32, #tpu.memory_space<vmem>>, vector<1x128xf32>
    %c0_84 = arith.constant 0 : index
    %c0_85 = arith.constant 0 : index
    %227 = vector.load %arg4[%c0_84, %c0_85] : memref<32x128xf32, #tpu.memory_space<vmem>>, vector<32x128xf32>
    %cst_86 = arith.constant dense<0.000000e+00> : vector<1x128xf32>
    %228 = tpu.matmul %222, %227, %cst_86 {dimension_numbers = #tpu.dot_dimension_numbers<[1], [0], [0], [1], [0, 0, 1, 1], [], []>} : vector<1x32xf32>, vector<32x128xf32>, vector<1x128xf32> -> vector<1x128xf32>
    %229 = arith.addf %226, %228 : vector<1x128xf32>
    %230 = math.tanh %229 : vector<1x128xf32>
    %231 = arith.negf %229 : vector<1x128xf32>
    %232 = math.exp %231 : vector<1x128xf32>
    %cst_87 = arith.constant 1.000000e+00 : f32
    %233 = vector.broadcast %cst_87 : f32 to vector<1x128xf32>
    %234 = arith.addf %233, %232 : vector<1x128xf32>
    %235 = arith.divf %233, %234 : vector<1x128xf32>
    %236 = arith.select %84, %230, %235 : vector<1x128xi1>, vector<1x128xf32>
    %237 = vector.extract_strided_slice %236 {offsets = [0, 0], sizes = [1, 32], strides = [1, 1]} : vector<1x128xf32> to vector<1x32xf32>
    %238 = vector.extract_strided_slice %236 {offsets = [0, 32], sizes = [1, 32], strides = [1, 1]} : vector<1x128xf32> to vector<1x32xf32>
    %239 = vector.extract_strided_slice %236 {offsets = [0, 64], sizes = [1, 32], strides = [1, 1]} : vector<1x128xf32> to vector<1x32xf32>
    %240 = vector.extract_strided_slice %236 {offsets = [0, 96], sizes = [1, 32], strides = [1, 1]} : vector<1x128xf32> to vector<1x32xf32>
    %241 = arith.mulf %238, %220 : vector<1x32xf32>
    %242 = arith.mulf %237, %239 : vector<1x32xf32>
    %243 = arith.addf %241, %242 : vector<1x32xf32>
    %244 = math.tanh %243 : vector<1x32xf32>
    %245 = arith.mulf %240, %244 : vector<1x32xf32>
    %246 = arith.index_cast %c6_i32_82 : i32 to index
    %c0_88 = arith.constant 0 : index
    %247 = vector.load %arg11[%246, %c0_88] : memref<8x32xf32, #tpu.memory_space<vmem>>, vector<1x32xf32>
    tpu.vector_store %arg11[%246, %c0_88], %245 {strides = array<i32>} : memref<8x32xf32, #tpu.memory_space<vmem>>, vector<1x32xf32>,
    %c7_i32_89 = arith.constant 7 : i32
    %248 = arith.index_cast %c7_i32_89 : i32 to index
    %c0_90 = arith.constant 0 : index
    %249 = vector.load %arg10[%248, %c0_90] : memref<8x128xf32, #tpu.memory_space<vmem>>, vector<1x128xf32>
    %c0_91 = arith.constant 0 : index
    %c0_92 = arith.constant 0 : index
    %250 = vector.load %arg4[%c0_91, %c0_92] : memref<32x128xf32, #tpu.memory_space<vmem>>, vector<32x128xf32>
    %cst_93 = arith.constant dense<0.000000e+00> : vector<1x128xf32>
    %251 = tpu.matmul %245, %250, %cst_93 {dimension_numbers = #tpu.dot_dimension_numbers<[1], [0], [0], [1], [0, 0, 1, 1], [], []>} : vector<1x32xf32>, vector<32x128xf32>, vector<1x128xf32> -> vector<1x128xf32>
    %252 = arith.addf %249, %251 : vector<1x128xf32>
    %253 = math.tanh %252 : vector<1x128xf32>
    %254 = arith.negf %252 : vector<1x128xf32>
    %255 = math.exp %254 : vector<1x128xf32>
    %cst_94 = arith.constant 1.000000e+00 : f32
    %256 = vector.broadcast %cst_94 : f32 to vector<1x128xf32>
    %257 = arith.addf %256, %255 : vector<1x128xf32>
    %258 = arith.divf %256, %257 : vector<1x128xf32>
    %259 = arith.select %84, %253, %258 : vector<1x128xi1>, vector<1x128xf32>
    %260 = vector.extract_strided_slice %259 {offsets = [0, 0], sizes = [1, 32], strides = [1, 1]} : vector<1x128xf32> to vector<1x32xf32>
    %261 = vector.extract_strided_slice %259 {offsets = [0, 32], sizes = [1, 32], strides = [1, 1]} : vector<1x128xf32> to vector<1x32xf32>
    %262 = vector.extract_strided_slice %259 {offsets = [0, 64], sizes = [1, 32], strides = [1, 1]} : vector<1x128xf32> to vector<1x32xf32>
    %263 = vector.extract_strided_slice %259 {offsets = [0, 96], sizes = [1, 32], strides = [1, 1]} : vector<1x128xf32> to vector<1x32xf32>
    %264 = arith.mulf %261, %243 : vector<1x32xf32>
    %265 = arith.mulf %260, %262 : vector<1x32xf32>
    %266 = arith.addf %264, %265 : vector<1x32xf32>
    %267 = math.tanh %266 : vector<1x32xf32>
    %268 = arith.mulf %263, %267 : vector<1x32xf32>
    %269 = arith.index_cast %c7_i32_89 : i32 to index
    %c0_95 = arith.constant 0 : index
    %270 = vector.load %arg11[%269, %c0_95] : memref<8x32xf32, #tpu.memory_space<vmem>>, vector<1x32xf32>
    tpu.vector_store %arg11[%269, %c0_95], %268 {strides = array<i32>} : memref<8x32xf32, #tpu.memory_space<vmem>>, vector<1x32xf32>,
    %c8_i32_96 = arith.constant 8 : i32
    %c0_97 = arith.constant 0 : index
    %c0_98 = arith.constant 0 : index
    %271 = vector.load %arg11[%c0_97, %c0_98] : memref<8x32xf32, #tpu.memory_space<vmem>>, vector<8x32xf32>
    %c0_99 = arith.constant 0 : index
    %c0_100 = arith.constant 0 : index
    %272 = vector.load %arg6[%c0_99, %c0_100] : memref<32x8xf32, #tpu.memory_space<vmem>>, vector<32x8xf32>
    %cst_101 = arith.constant dense<0.000000e+00> : vector<8x8xf32>
    %273 = tpu.matmul %271, %272, %cst_101 {dimension_numbers = #tpu.dot_dimension_numbers<[1], [0], [0], [1], [0, 0, 1, 1], [], []>} : vector<8x32xf32>, vector<32x8xf32>, vector<8x8xf32> -> vector<8x8xf32>
    %c0_102 = arith.constant 0 : index
    %c0_103 = arith.constant 0 : index
    %274 = vector.load %arg7[%c0_102, %c0_103] : memref<1x8xf32, #tpu.memory_space<vmem>>, vector<1x8xf32>
    %275 = vector.broadcast %274 : vector<1x8xf32> to vector<8x8xf32>
    %276 = arith.addf %273, %275 : vector<8x8xf32>
    %cst_104 = arith.constant dense<0xFF800000> : vector<8xf32>
    %277 = vector.multi_reduction <maximumf>, %276, %cst_104 [1] : vector<8x8xf32> to vector<8xf32>
    %278 = vector.shape_cast %277 : vector<8xf32> to vector<8x1xf32>
    %279 = vector.broadcast %278 : vector<8x1xf32> to vector<8x8xf32>
    %280 = arith.subf %276, %279 : vector<8x8xf32>
    %281 = math.exp %280 : vector<8x8xf32>
    %cst_105 = arith.constant dense<0.000000e+00> : vector<8xf32>
    %282 = vector.multi_reduction <add>, %281, %cst_105 [1] : vector<8x8xf32> to vector<8xf32>
    %283 = vector.shape_cast %282 : vector<8xf32> to vector<8x1xf32>
    %284 = math.log %283 : vector<8x1xf32>
    %285 = vector.broadcast %284 : vector<8x1xf32> to vector<8x8xf32>
    %286 = arith.subf %280, %285 : vector<8x8xf32>
    %c0_106 = arith.constant 0 : index
    %c0_107 = arith.constant 0 : index
    %c0_108 = arith.constant 0 : index
    %287 = vector.load %arg8[%c0_106, %c0_107, %c0_108] : memref<1x8x8xf32, #tpu.memory_space<vmem>>, vector<1x8x8xf32>
    %288 = vector.shape_cast %287 : vector<1x8x8xf32> to vector<8x8xf32>
    %289 = vector.shape_cast %286 : vector<8x8xf32> to vector<1x8x8xf32>
    tpu.vector_store %arg8[%c0_106, %c0_107, %c0_108], %289 {strides = array<i32>} : memref<1x8x8xf32, #tpu.memory_space<vmem>>, vector<1x8x8xf32>,
    return
  }
  func.func @transform_0(%arg0: i32, %arg1: memref<2x8xi32, #tpu.memory_space<smem>>) -> (i32, i32) {
    %c0_i32 = arith.constant 0 : i32
    %c0_i32_0 = arith.constant 0 : i32
    %c0_i32_1 = arith.constant 0 : i32
    return %c0_i32, %c0_i32_0 : i32, i32
  }
  func.func @transform_1(%arg0: i32, %arg1: memref<2x8xi32, #tpu.memory_space<smem>>) -> (i32, i32) {
    %c0_i32 = arith.constant 0 : i32
    %c0_i32_0 = arith.constant 0 : i32
    %c0_i32_1 = arith.constant 0 : i32
    return %c0_i32, %c0_i32_0 : i32, i32
  }
  func.func @transform_2(%arg0: i32, %arg1: memref<2x8xi32, #tpu.memory_space<smem>>) -> (i32, i32) {
    %c0_i32 = arith.constant 0 : i32
    %c0_i32_0 = arith.constant 0 : i32
    %c0_i32_1 = arith.constant 0 : i32
    return %c0_i32, %c0_i32_0 : i32, i32
  }
  func.func @transform_3(%arg0: i32, %arg1: memref<2x8xi32, #tpu.memory_space<smem>>) -> (i32, i32) {
    %c0_i32 = arith.constant 0 : i32
    %c0_i32_0 = arith.constant 0 : i32
    %c0_i32_1 = arith.constant 0 : i32
    return %c0_i32, %c0_i32_0 : i32, i32
  }
  func.func @transform_4(%arg0: i32, %arg1: memref<2x8xi32, #tpu.memory_space<smem>>) -> (i32, i32) {
    %c0_i32 = arith.constant 0 : i32
    %c0_i32_0 = arith.constant 0 : i32
    %c0_i32_1 = arith.constant 0 : i32
    return %c0_i32, %c0_i32_0 : i32, i32
  }
  func.func @transform_5(%arg0: i32, %arg1: memref<2x8xi32, #tpu.memory_space<smem>>) -> (i32, i32) {
    %c0_i32 = arith.constant 0 : i32
    %c0_i32_0 = arith.constant 0 : i32
    %c0_i32_1 = arith.constant 0 : i32
    return %c0_i32, %c0_i32_0 : i32, i32
  }
  func.func @transform_6(%arg0: i32, %arg1: memref<2x8xi32, #tpu.memory_space<smem>>) -> (i32, i32, i32) {
    %c0_i32 = arith.constant 0 : i32
    %c0_i32_0 = arith.constant 0 : i32
    %c0_i32_1 = arith.constant 0 : i32
    return %arg0, %c0_i32, %c0_i32_0 : i32, i32, i32
  }
}

</mosaic_0001>

<llo_original>
// kernel: lstm_tagger_forward_batched.1
$region0: #{lstm_tagger_forward_batched.1}
  #allocation0 [shape = 'u32[]', space=smem, size = 0x4, offset = 0x4, fixed_abs, tag = 'smem constant byte address 0x4 - core index']
  #allocation1 [shape = 'u32[144,128]{1,0:T(1,128)}', space=vmem, size = 0x12000, scoped, tag = 'internal scratch']
  #allocation2 [shape = 'f32[8,32]{1,0:T(8,128)}', space=vmem, size = 0x1000, scoped, tag = 'scratch operand']
  #allocation3 [shape = 'f32[8,128]{1,0:T(8,128)}', space=vmem, size = 0x1000, scoped, tag = 'scratch operand']
  #allocation4 [shape = 'f32[8,32]{1,0:T(8,128)}', space=vmem, size = 0x1000, scoped, tag = 'scratch operand']
  #allocation5 [shape = 's32[1]{0}', space=sflag, size = 0x4, scoped, tag = 'scoped memory for lstm_tagger_forward_batched.1']
  #allocation6 [shape = 'u8[1024]{0}', space=smem, size = 0x400, scoped, tag = 'prefetched SMEM operand 0']
  %s0 = inlined_call_operand.vmem [shape: s32[2,8], index: 0, kind: input, shape index: {}]
  %s1 = inlined_call_operand.vmem [shape: f32[20,32], index: 1, kind: input, shape index: {}]
  %s2 = inlined_call_operand.vmem [shape: f32[32,128], index: 2, kind: input, shape index: {}]
  %s3 = inlined_call_operand.hbm [shape: f32[32,128], index: 3, kind: input, shape index: {}]
  %s4 = inlined_call_operand.hbm [shape: f32[1,128], index: 4, kind: input, shape index: {}]
  %s5 = inlined_call_operand.vmem [shape: f32[32,8], index: 5, kind: input, shape index: {}]
  %s6 = inlined_call_operand.hbm [shape: f32[1,8], index: 6, kind: input, shape index: {}]
  %s7 = inlined_call_operand.hbm [shape: f32[2,8,8], index: 7, kind: output, shape index: {}]
  %s8 = sld [smem:[#allocation0]]
  $region69: #{lstm_tagger_forward_batched.1} parent=0
    _
  %s10 = ssub.s32 1, %s8
  %s11 = scalar_select 0, %s10, %s8
  %s12 = sshll.u32 %s0, 4
  %s13 = int_to_ptr.vmem [resolvable:$true] %s12
  %15 = dma.vmem_to_smem %s13, 32, [#allocation6], [#allocation5]
  %16 = dma.done [#allocation5], 32
  %17 = sfence
  $region1: #{lstm_tagger_forward_batched.1} parent=0
    #allocation7 [shape = 'u8[16384]{0}', space=vmem, size = 0x4000, scoped, tag = 'input window, operand 3, single buffered']
    #allocation8 [shape = 's32[2]{0}', space=sflag, size = 0x8, scoped, tag = 'scoped memory for lstm_tagger_forward_batched.1']
    #allocation9 [shape = 's32[2]{0}', space=sflag, size = 0x8, scoped, tag = 'scoped memory for lstm_tagger_forward_batched.1']
    #allocation10 [shape = 'u8[512]{0}', space=vmem, size = 0x400, scoped, tag = 'input window, operand 4, single buffered']
    #allocation11 [shape = 's32[1]{0}', space=sflag, size = 0x4, scoped, tag = 'scoped memory for lstm_tagger_forward_batched.1']
    #allocation12 [shape = 'u8[512]{0}', space=vmem, size = 0x400, scoped, tag = 'input window, operand 6, single buffered']
    #allocation13 [shape = 'u8[8192]{0}', space=vmem, size = 0x2000, scoped, tag = 'output window, operand 0']
    %18 = vsyncpa [#allocation8], 0
    %19 = vsyncpa [#allocation11], 0
    %20 = vsyncpa [#allocation9], 0
    %s21 = scalar_lea.sflag [#allocation9], 1
    %22 = vsyncpa %s21, 0
    loop: start=0, step=1, limit=4
    $region2: #{lstm_tagger_forward_batched.1} parent=1 // loop_pre_header
      _
    $region3: #{lstm_tagger_forward_batched.1} parent=1 // loop_header
      %s24 = sphi 0, %s28
      %p25 = scmp.ge.s32.totalorder %s24, 4
      %s32 = sphi 0, %s32
      %s34 = sphi 0, %s32
      %s35 = sphi 0, %s34
      %s49 = sphi 0, %s35
      %s53 = sphi 0, %s53
      %s55 = sphi 0, %s53
      %s56 = sphi 0, %s55
      %s70 = sphi 0, %s56
      %s74 = sphi 0, %s74
      %s76 = sphi 0, %s74
      %s77 = sphi 0, %s76
      %s91 = sphi 0, %s77
      %s95 = sphi 0, %s95
      %s97 = sphi 0, %s95
      %s98 = sphi 0, %s97
      %s112 = sphi 0, %s98
      %s116 = sphi 0, %s116
      %s118 = sphi 0, %s116
      %s119 = sphi 0, %s118
      %s133 = sphi 0, %s119
      %s137 = sphi 0, %s137
      %s139 = sphi 0, %s137
      %s140 = sphi 0, %s139
      %s154 = sphi 0, %s140
      %s160 = sphi 0, %s162
      %s163 = sphi 0, %s160
      %s164 = sphi 0, %s163
      %s180 = sphi 0, %s164
    $region4: #{lstm_tagger_forward_batched.1} parent=1 // loop_header_branch
      %27 = sbr.rel (%p25) target = $region8
    $region5: #{lstm_tagger_forward_batched.1} parent=1 // loop_body
      %s29 = ssub.s32 %s24, 1
      %s30 = ssub.s32 %s24, 2
      %s31 = sadd.s32 %s24, 1
      %s33 = sadd.s32 %s32, 1
      %p36 = scmp.eq.s32.totalorder %s24, 1
      %p37 = scmp.ne.s32.totalorder %s32, %s34
      %p38 = scmp.eq.s32.totalorder %s24, 0
      %p39 = por %p37, %p38
      %p40 = scmp.ne.s32.totalorder %s32, %s34
      %p41 = scmp.eq.s32.totalorder %s29, 1
      %p42 = por %p40, %p41
      %p43 = scmp.ne.s32.totalorder %s34, %s35
      %p44 = scmp.eq.s32.totalorder %s29, 0
      %p45 = por %p43, %p44
      %p46 = scmp.ne.s32.totalorder %s34, %s35
      %p47 = scmp.eq.s32.totalorder %s30, 1
      %p48 = por %p46, %p47
      %p50 = scmp.ne.s32.totalorder %s35, %s49
      %p51 = scmp.eq.s32.totalorder %s30, 0
      %p52 = por %p50, %p51
      %s54 = sadd.s32 %s53, 1
      %p57 = scmp.eq.s32.totalorder %s24, 1
      %p58 = scmp.ne.s32.totalorder %s53, %s55
      %p59 = scmp.eq.s32.totalorder %s24, 0
      %p60 = por %p58, %p59
      %p61 = scmp.ne.s32.totalorder %s53, %s55
      %p62 = scmp.eq.s32.totalorder %s29, 1
      %p63 = por %p61, %p62
      %p64 = scmp.ne.s32.totalorder %s55, %s56
      %p65 = scmp.eq.s32.totalorder %s29, 0
      %p66 = por %p64, %p65
      %p67 = scmp.ne.s32.totalorder %s55, %s56
      %p68 = scmp.eq.s32.totalorder %s30, 1
      %p69 = por %p67, %p68
      %p71 = scmp.ne.s32.totalorder %s56, %s70
      %p72 = scmp.eq.s32.totalorder %s30, 0
      %p73 = por %p71, %p72
      %s75 = sadd.s32 %s74, 1
      %p78 = scmp.eq.s32.totalorder %s24, 1
      %p79 = scmp.ne.s32.totalorder %s74, %s76
      %p80 = scmp.eq.s32.totalorder %s24, 0
      %p81 = por %p79, %p80
      %p82 = scmp.ne.s32.totalorder %s74, %s76
      %p83 = scmp.eq.s32.totalorder %s29, 1
      %p84 = por %p82, %p83
      %p85 = scmp.ne.s32.totalorder %s76, %s77
      %p86 = scmp.eq.s32.totalorder %s29, 0
      %p87 = por %p85, %p86
      %p88 = scmp.ne.s32.totalorder %s76, %s77
      %p89 = scmp.eq.s32.totalorder %s30, 1
      %p90 = por %p88, %p89
      %p92 = scmp.ne.s32.totalorder %s77, %s91
      %p93 = scmp.eq.s32.totalorder %s30, 0
      %p94 = por %p92, %p93
      %s96 = sadd.s32 %s95, 1
      %p99 = scmp.eq.s32.totalorder %s24, 1
      %p100 = scmp.ne.s32.totalorder %s95, %s97
      %p101 = scmp.eq.s32.totalorder %s24, 0
      %p102 = por %p100, %p101
      %p103 = scmp.ne.s32.totalorder %s95, %s97
      %p104 = scmp.eq.s32.totalorder %s29, 1
      %p105 = por %p103, %p104
      %p106 = scmp.ne.s32.totalorder %s97, %s98
      %p107 = scmp.eq.s32.totalorder %s29, 0
      %p108 = por %p106, %p107
      %p109 = scmp.ne.s32.totalorder %s97, %s98
      %p110 = scmp.eq.s32.totalorder %s30, 1
      %p111 = por %p109, %p110
      %p113 = scmp.ne.s32.totalorder %s98, %s112
      %p114 = scmp.eq.s32.totalorder %s30, 0
      %p115 = por %p113, %p114
      %s117 = sadd.s32 %s116, 1
      %p120 = scmp.eq.s32.totalorder %s24, 1
      %p121 = scmp.ne.s32.totalorder %s116, %s118
      %p122 = scmp.eq.s32.totalorder %s24, 0
      %p123 = por %p121, %p122
      %p124 = scmp.ne.s32.totalorder %s116, %s118
      %p125 = scmp.eq.s32.totalorder %s29, 1
      %p126 = por %p124, %p125
      %p127 = scmp.ne.s32.totalorder %s118, %s119
      %p128 = scmp.eq.s32.totalorder %s29, 0
      %p129 = por %p127, %p128
      %p130 = scmp.ne.s32.totalorder %s118, %s119
      %p131 = scmp.eq.s32.totalorder %s30, 1
      %p132 = por %p130, %p131
      %p134 = scmp.ne.s32.totalorder %s119, %s133
      %p135 = scmp.eq.s32.totalorder %s30, 0
      %p136 = por %p134, %p135
      %s138 = sadd.s32 %s137, 1
      %p141 = scmp.eq.s32.totalorder %s24, 1
      %p142 = scmp.ne.s32.totalorder %s137, %s139
      %p143 = scmp.eq.s32.totalorder %s24, 0
      %p144 = por %p142, %p143
      %p145 = scmp.ne.s32.totalorder %s137, %s139
      %p146 = scmp.eq.s32.totalorder %s29, 1
      %p147 = por %p145, %p146
      %p148 = scmp.ne.s32.totalorder %s139, %s140
      %p149 = scmp.eq.s32.totalorder %s29, 0
      %p150 = por %p148, %p149
      %p151 = scmp.ne.s32.totalorder %s139, %s140
      %p152 = scmp.eq.s32.totalorder %s30, 1
      %p153 = por %p151, %p152
      %p155 = scmp.ne.s32.totalorder %s140, %s154
      %p156 = scmp.eq.s32.totalorder %s30, 0
      %p157 = por %p155, %p156
      %s158 = ssub.s32 %s24, %s31
      %p159 = scmp.eq.s32.totalorder %s158, 0
      %s161 = sadd.s32 %s160, 1
      %s162 = scalar_select %p159, %s160, %s161
      %p165 = pneg %p159
      %p166 = scmp.eq.s32.totalorder %s24, 1
      %p167 = por %p165, %p166
      %p168 = scmp.ne.s32.totalorder %s160, %s163
      %p169 = scmp.eq.s32.totalorder %s24, 0
      %p170 = por %p168, %p169
      %p171 = scmp.ne.s32.totalorder %s160, %s163
      %p172 = scmp.eq.s32.totalorder %s29, 1
      %p173 = por %p171, %p172
      %p174 = scmp.ne.s32.totalorder %s163, %s164
      %p175 = scmp.eq.s32.totalorder %s29, 0
      %p176 = por %p174, %p175
      %p177 = scmp.ne.s32.totalorder %s163, %s164
      %p178 = scmp.eq.s32.totalorder %s30, 1
      %p179 = por %p177, %p178
      %p181 = scmp.ne.s32.totalorder %s164, %s180
      %p182 = scmp.eq.s32.totalorder %s30, 0
      %p183 = por %p181, %p182
      %p184 = scmp.le.s32.totalorder 1, %s24
      %p185 = scmp.lt.s32.totalorder %s24, 3
      %p186 = pnand %p184, %p185
      %p187 = pneg %p186
      // Predicated region
      $region9: #{lstm_tagger_forward_batched.1} parent=5 // pred_check
        _
      $region10: #{lstm_tagger_forward_batched.1} parent=5 // pred_check_branch
        %189 = sbr.rel (%p186) target = $region12
      $region11: #{lstm_tagger_forward_batched.1} parent=5 // pred_region
        %s190 = ssub.s32 %s24, 1
        // Predicated region
        $region13: #{lstm_tagger_forward_batched.1} parent=11 // pred_check
          %p191 = pneg %p45
        $region14: #{lstm_tagger_forward_batched.1} parent=11 // pred_check_branch
          %193 = sbr.rel (%p191) target = $region16
        $region15: #{lstm_tagger_forward_batched.1} parent=11 // pred_region
          _
        $region16: #{lstm_tagger_forward_batched.1} parent=11 // pred_fallthru
          _
        // Predicated region
        $region17: #{lstm_tagger_forward_batched.1} parent=11 // pred_check
          %p194 = pneg %p66
        $region18: #{lstm_tagger_forward_batched.1} parent=11 // pred_check_branch
          %196 = sbr.rel (%p194) target = $region20
        $region19: #{lstm_tagger_forward_batched.1} parent=11 // pred_region
          _
        $region20: #{lstm_tagger_forward_batched.1} parent=11 // pred_fallthru
          _
        // Predicated region
        $region21: #{lstm_tagger_forward_batched.1} parent=11 // pred_check
          %p197 = pneg %p87
        $region22: #{lstm_tagger_forward_batched.1} parent=11 // pred_check_branch
          %199 = sbr.rel (%p197) target = $region24
        $region23: #{lstm_tagger_forward_batched.1} parent=11 // pred_region
          %s201 = ssub.s32 512, 512
          %202 = vsyncadd [#allocation8], %s201
          %s203 = sshll.u32 [#allocation7], 4
          %s204 = int_to_ptr.vmem [resolvable:$true] %s203
          %209 = dma.hbm_to_vmem [thread:$0]  %s3, 512, %s204, [#allocation8], 128, 128, 8
        $region24: #{lstm_tagger_forward_batched.1} parent=11 // pred_fallthru
          _
        // Predicated region
        $region25: #{lstm_tagger_forward_batched.1} parent=11 // pred_check
          %p210 = pneg %p108
        $region26: #{lstm_tagger_forward_batched.1} parent=11 // pred_check_branch
          %212 = sbr.rel (%p210) target = $region28
        $region27: #{lstm_tagger_forward_batched.1} parent=11 // pred_region
          %s214 = ssub.s32 16, 16
          %215 = vsyncadd [#allocation11], %s214
          %s217 = sshll.u32 [#allocation10], 4
          %s218 = int_to_ptr.vmem [resolvable:$true] %s217
          %220 = dma.hbm_to_vmem [thread:$0]  %s4, 16, %s218, [#allocation11]
        $region28: #{lstm_tagger_forward_batched.1} parent=11 // pred_fallthru
          _
        // Predicated region
        $region29: #{lstm_tagger_forward_batched.1} parent=11 // pred_check
          %p221 = pneg %p129
        $region30: #{lstm_tagger_forward_batched.1} parent=11 // pred_check_branch
          %223 = sbr.rel (%p221) target = $region32
        $region31: #{lstm_tagger_forward_batched.1} parent=11 // pred_region
          _
        $region32: #{lstm_tagger_forward_batched.1} parent=11 // pred_fallthru
          _
        // Predicated region
        $region33: #{lstm_tagger_forward_batched.1} parent=11 // pred_check
          %p224 = pneg %p150
        $region34: #{lstm_tagger_forward_batched.1} parent=11 // pred_check_branch
          %226 = sbr.rel (%p224) target = $region36
        $region35: #{lstm_tagger_forward_batched.1} parent=11 // pred_region
          %s228 = ssub.s32 16, 16
          %229 = vsyncadd [#allocation11], %s228
          %s231 = sshll.u32 [#allocation12], 4
          %s232 = int_to_ptr.vmem [resolvable:$true] %s231
          %234 = dma.hbm_to_vmem [thread:$0]  %s6, 16, %s232, [#allocation11]
        $region36: #{lstm_tagger_forward_batched.1} parent=11 // pred_fallthru
          _
      $region12: #{lstm_tagger_forward_batched.1} parent=5 // pred_fallthru
        _
      %p235 = scmp.lt.s32.totalorder %s24, 2
      // Predicated region
      $region37: #{lstm_tagger_forward_batched.1} parent=5 // pred_check
        %p236 = pneg %p235
      $region38: #{lstm_tagger_forward_batched.1} parent=5 // pred_check_branch
        %238 = sbr.rel (%p236) target = $region40
      $region39: #{lstm_tagger_forward_batched.1} parent=5 // pred_region
        _
      $region40: #{lstm_tagger_forward_batched.1} parent=5 // pred_fallthru
        _
      %p239 = scmp.le.s32.totalorder 1, %s24
      %p240 = scmp.lt.s32.totalorder %s24, 3
      %p241 = pnand %p239, %p240
      %p242 = pneg %p241
      // Predicated region
      $region41: #{lstm_tagger_forward_batched.1} parent=5 // pred_check
        _
      $region42: #{lstm_tagger_forward_batched.1} parent=5 // pred_check_branch
        %244 = sbr.rel (%p241) target = $region44
      $region43: #{lstm_tagger_forward_batched.1} parent=5 // pred_region
        %s245 = ssub.s32 %s24, 1
        // Predicated region
        $region45: #{lstm_tagger_forward_batched.1} parent=43 // pred_check
          %p246 = pneg %p87
        $region46: #{lstm_tagger_forward_batched.1} parent=43 // pred_check_branch
          %248 = sbr.rel (%p246) target = $region48
        $region47: #{lstm_tagger_forward_batched.1} parent=43 // pred_region
          %249 = dma.done [#allocation8], 512
        $region48: #{lstm_tagger_forward_batched.1} parent=43 // pred_fallthru
          _
        // Predicated region
        $region49: #{lstm_tagger_forward_batched.1} parent=43 // pred_check
          %p250 = pneg %p108
        $region50: #{lstm_tagger_forward_batched.1} parent=43 // pred_check_branch
          %252 = sbr.rel (%p250) target = $region52
        $region51: #{lstm_tagger_forward_batched.1} parent=43 // pred_region
          %253 = dma.done [#allocation11], 16
        $region52: #{lstm_tagger_forward_batched.1} parent=43 // pred_fallthru
          _
        // Predicated region
        $region53: #{lstm_tagger_forward_batched.1} parent=43 // pred_check
          %p254 = pneg %p150
        $region54: #{lstm_tagger_forward_batched.1} parent=43 // pred_check_branch
          %256 = sbr.rel (%p254) target = $region56
        $region55: #{lstm_tagger_forward_batched.1} parent=43 // pred_region
          %257 = dma.done [#allocation11], 16
        $region56: #{lstm_tagger_forward_batched.1} parent=43 // pred_fallthru
          _
        %p258 = pneg %p45
        %p259 = pneg %p42
        %p260 = pneg %p66
        %p261 = pneg %p63
        %p262 = pneg %p87
        %p263 = pneg %p84
        %p264 = pneg %p108
        %p265 = pneg %p105
        %p266 = pneg %p129
        %p267 = pneg %p126
        %p268 = pneg %p150
        %p269 = pneg %p147
        %p270 = pneg %p176
        %p271 = pneg %p173
        %s272 = sand.u32 %s163, 1
        %s273 = scalar_lea.sflag [#allocation9], %s272
        %s274 = sand.u32 %s163, 1
        %s275 = smul.addr %s274, 8
        %s276 = scalar_lea.vmem [#allocation13], %s275
        %s277 = smul.u32 %s29, 128
        %s278 = sld [smem:[#allocation6 + %s277]]
        %p279 = scmp.gt.s32.totalorder %s278, 0
        %s280 = scalar_select %p279, %s278, 0
        %p281 = scmp.lt.s32.totalorder %s280, 19
        %s282 = scalar_select %p281, %s280, 19
        %s283 = scalar_lea.vmem %s1, %s282
        %v284 = vld [vmem:[%s283] sm:$0x1]
        %vm285 = vcmask 253952
        %286 = vst.msk [vmem:[#allocation2] sm:$0x1] %vm285, %v284
        %s287 = sadd.s32 %s277, 1
        %s288 = sld [smem:[#allocation6 + %s287]]
        %p289 = scmp.gt.s32.totalorder %s288, 0
        %s290 = scalar_select %p289, %s288, 0
        %p291 = scmp.lt.s32.totalorder %s290, 19
        %s292 = scalar_select %p291, %s290, 19
        %s293 = scalar_lea.vmem %s1, %s292
        %v294 = vld [vmem:[%s293] sm:$0x1]
        %295 = vst.msk [vmem:[#allocation2 + $0x1] sm:$0x1] %vm285, %v294
        %s296 = sadd.s32 %s277, 2
        %s297 = sld [smem:[#allocation6 + %s296]]
        %p298 = scmp.gt.s32.totalorder %s297, 0
        %s299 = scalar_select %p298, %s297, 0
        %p300 = scmp.lt.s32.totalorder %s299, 19
        %s301 = scalar_select %p300, %s299, 19
        %s302 = scalar_lea.vmem %s1, %s301
        %v303 = vld [vmem:[%s302] sm:$0x1]
        %304 = vst.msk [vmem:[#allocation2 + $0x2] sm:$0x1] %vm285, %v303
        %s305 = sadd.s32 %s277, 3
        %s306 = sld [smem:[#allocation6 + %s305]]
        %p307 = scmp.gt.s32.totalorder %s306, 0
        %s308 = scalar_select %p307, %s306, 0
        %p309 = scmp.lt.s32.totalorder %s308, 19
        %s310 = scalar_select %p309, %s308, 19
        %s311 = scalar_lea.vmem %s1, %s310
        %v312 = vld [vmem:[%s311] sm:$0x1]
        %313 = vst.msk [vmem:[#allocation2 + $0x3] sm:$0x1] %vm285, %v312
        %s314 = sadd.s32 %s277, 4
        %s315 = sld [smem:[#allocation6 + %s314]]
        %p316 = scmp.gt.s32.totalorder %s315, 0
        %s317 = scalar_select %p316, %s315, 0
        %p318 = scmp.lt.s32.totalorder %s317, 19
        %s319 = scalar_select %p318, %s317, 19
        %s320 = scalar_lea.vmem %s1, %s319
        %v321 = vld [vmem:[%s320] sm:$0x1]
        %322 = vst.msk [vmem:[#allocation2 + $0x4] sm:$0x1] %vm285, %v321
        %s323 = sadd.s32 %s277, 5
        %s324 = sld [smem:[#allocation6 + %s323]]
        %p325 = scmp.gt.s32.totalorder %s324, 0
        %s326 = scalar_select %p325, %s324, 0
        %p327 = scmp.lt.s32.totalorder %s326, 19
        %s328 = scalar_select %p327, %s326, 19
        %s329 = scalar_lea.vmem %s1, %s328
        %v330 = vld [vmem:[%s329] sm:$0x1]
        %331 = vst.msk [vmem:[#allocation2 + $0x5] sm:$0x1] %vm285, %v330
        %s332 = sadd.s32 %s277, 6
        %s333 = sld [smem:[#allocation6 + %s332]]
        %p334 = scmp.gt.s32.totalorder %s333, 0
        %s335 = scalar_select %p334, %s333, 0
        %p336 = scmp.lt.s32.totalorder %s335, 19
        %s337 = scalar_select %p336, %s335, 19
        %s338 = scalar_lea.vmem %s1, %s337
        %v339 = vld [vmem:[%s338] sm:$0x1]
        %340 = vst.msk [vmem:[#allocation2 + $0x6] sm:$0x1] %vm285, %v339
        %s341 = sadd.s32 %s277, 7
        %s342 = sld [smem:[#allocation6 + %s341]]
        %p343 = scmp.gt.s32.totalorder %s342, 0
        %s344 = scalar_select %p343, %s342, 0
        %p345 = scmp.lt.s32.totalorder %s344, 19
        %s346 = scalar_select %p345, %s344, 19
        %s347 = scalar_lea.vmem %s1, %s346
        %v348 = vld [vmem:[%s347] sm:$0x1]
        %349 = vst.msk [vmem:[#allocation2 + $0x7] sm:$0x1] %vm285, %v348
        %v350 = vld [vmem:[#allocation2] sm:$0xff]
        %v351 = vld [vmem:[%s2] sm:$0xff]
        %v352 = vld [vmem:[%s2 + $0x8] sm:$0xff]
        %v353 = vld [vmem:[%s2 + $0x10] sm:$0xff]
        %v354 = vld [vmem:[%s2 + $0x18] sm:$0xff]
        %v355 = vld [vmem:[#allocation10] sm:$0x1]
        %v357 = vlaneseq
        %v358 = vshrl.u32 %v357, 7
        %v359 = vsub.s32 0, %v358
        %v360 = vrot.slane %v355, %v359
        %vm362 = vcmask 261120
        %v364 = vsel %vm362, %v350, 0
        %366 = vmatprep.subr.mxu0 0.0
        %367 = vmatpush1.msra.mxu0 %v351
        %368 = vmatprep.subr.mxu0 0.0
        %369 = vmatpush1.msra.mxu0 %v352
        %370 = vmatprep.subr.mxu0 0.0
        %371 = vmatpush1.msra.mxu0 %v353
        %372 = vmatprep.subr.mxu0 0.0
        %373 = vmatpush1.msra.mxu0 %v354
        %374 = vmatprep.subr.mxu0 0.0
        %375 = vmatpush1.msra.mxu0 0.0
        %376 = vmatprep.subr.mxu0 0.0
        %377 = vmatpush1.msra.mxu0 0.0
        %378 = vmatprep.subr.mxu0 0.0
        %379 = vmatpush1.msra.mxu0 0.0
        %380 = vmatprep.subr.mxu0 0.0
        %381 = vmatpush1.msra.mxu0 0.0
        %382 = vmatprep.subr.mxu0 0.0
        %383 = vmatpush1.msra.mxu0 0.0
        %384 = vmatprep.subr.mxu0 0.0
        %385 = vmatpush1.msra.mxu0 0.0
        %386 = vmatprep.subr.mxu0 0.0
        %387 = vmatpush1.msra.mxu0 0.0
        %388 = vmatprep.subr.mxu0 0.0
        %389 = vmatpush1.msra.mxu0 0.0
        %390 = vmatprep.subr.mxu0 0.0
        %391 = vmatpush1.msra.mxu0 0.0
        %392 = vmatprep.subr.mxu0 0.0
        %393 = vmatpush1.msra.mxu0 0.0
        %394 = vmatprep.subr.mxu0 0.0
        %395 = vmatpush1.msra.mxu0 0.0
        %396 = vmatprep.subr.mxu0 0.0
        %397 = vmatpush1.msra.mxu0 0.0
        %398 = vmatprep.subr.mxu0 0.0
        %399 = vmatpush1.msra.mxu0 0.0
        %400 = vmatprep.subr.mxu0 0.0
        %401 = vmatpush1.msra.mxu0 0.0
        %402 = vmatprep.subr.mxu0 0.0
        %403 = vmatpush1.msra.mxu0 0.0
        %404 = vmatprep.subr.mxu0 0.0
        %405 = vmatpush1.msra.mxu0 0.0
        %406 = vmatprep.subr.mxu0 0.0
        %407 = vmatpush1.msra.mxu0 0.0
        %408 = vmatprep.subr.mxu0 0.0
        %409 = vmatpush1.msra.mxu0 0.0
        %410 = vmatprep.subr.mxu0 0.0
        %411 = vmatpush1.msra.mxu0 0.0
        %412 = vmatprep.subr.mxu0 0.0
        %413 = vmatpush1.msra.mxu0 0.0
        %414 = vmatprep.subr.mxu0 0.0
        %415 = vmatpush1.msra.mxu0 0.0
        %416 = vmatprep.subr.mxu0 0.0
        %417 = vmatpush1.msra.mxu0 0.0
        %418 = vmatprep.subr.mxu0 0.0
        %419 = vmatpush1.msra.mxu0 0.0
        %420 = vmatprep.subr.mxu0 0.0
        %421 = vmatpush1.msra.mxu0 0.0
        %422 = vmatprep.subr.mxu0 0.0
        %423 = vmatpush1.msra.mxu0 0.0
        %424 = vmatprep.subr.mxu0 0.0
        %425 = vmatpush1.msra.mxu0 0.0
        %426 = vmatprep.subr.mxu0 0.0
        %427 = vmatpush1.msra.mxu0 0.0
        %428 = vmatprep.subr.mxu0 0.0
        %429 = vmatpush1.msra.mxu0 0.0
        %430 = vmatprep.mubr.f32.mxu0 0.0
        %431 = vmatmul.mubr.f32.gmra.mrb[0].mxu0 %v364
        %v432 = vpop.f32.mrb[0].mxu0
        %v433 = vadd.f32 %v360, %v432
        %v434 = vpop.f32.mrb[0].mxu0
        %435 = vdwg.mxu0
        %436 = vst [vmem:[#allocation3] sm:$0xff] %v433
        %v437 = vlaneseq
        %v438 = vand.u32 %v437, 127
        %vm439 = vcmp.ge.s32.totalorder %v438, 64
        %vm440 = vcmp.lt.s32.totalorder %v438, 96
        %vm441 = vmand %vm439, %vm440
        %v442 = vld [vmem:[#allocation3] sm:$0x1]
        %v443 = vld [vmem:[#allocation7] sm:$0xff]
        %v444 = vld [vmem:[#allocation7 + $0x8] sm:$0xff]
        %v445 = vld [vmem:[#allocation7 + $0x10] sm:$0xff]
        %v446 = vld [vmem:[#allocation7 + $0x18] sm:$0xff]
        %v448 = vsel %vm362, 0.0, 0
        %450 = vmatprep.subr.mxu0 0.0
        %451 = vmatpush1.msra.mxu0 %v443
        %452 = vmatprep.subr.mxu0 0.0
        %453 = vmatpush1.msra.mxu0 %v444
        %454 = vmatprep.subr.mxu0 0.0
        %455 = vmatpush1.msra.mxu0 %v445
        %456 = vmatprep.subr.mxu0 0.0
        %457 = vmatpush1.msra.mxu0 %v446
        %458 = vmatprep.subr.mxu0 0.0
        %459 = vmatpush1.msra.mxu0 0.0
        %460 = vmatprep.subr.mxu0 0.0
        %461 = vmatpush1.msra.mxu0 0.0
        %462 = vmatprep.subr.mxu0 0.0
        %463 = vmatpush1.msra.mxu0 0.0
        %464 = vmatprep.subr.mxu0 0.0
        %465 = vmatpush1.msra.mxu0 0.0
        %466 = vmatprep.subr.mxu0 0.0
        %467 = vmatpush1.msra.mxu0 0.0
        %468 = vmatprep.subr.mxu0 0.0
        %469 = vmatpush1.msra.mxu0 0.0
        %470 = vmatprep.subr.mxu0 0.0
        %471 = vmatpush1.msra.mxu0 0.0
        %472 = vmatprep.subr.mxu0 0.0
        %473 = vmatpush1.msra.mxu0 0.0
        %474 = vmatprep.subr.mxu0 0.0
        %475 = vmatpush1.msra.mxu0 0.0
        %476 = vmatprep.subr.mxu0 0.0
        %477 = vmatpush1.msra.mxu0 0.0
        %478 = vmatprep.subr.mxu0 0.0
        %479 = vmatpush1.msra.mxu0 0.0
        %480 = vmatprep.subr.mxu0 0.0
        %481 = vmatpush1.msra.mxu0 0.0
        %482 = vmatprep.subr.mxu0 0.0
        %483 = vmatpush1.msra.mxu0 0.0
        %484 = vmatprep.subr.mxu0 0.0
        %485 = vmatpush1.msra.mxu0 0.0
        %486 = vmatprep.subr.mxu0 0.0
        %487 = vmatpush1.msra.mxu0 0.0
        %488 = vmatprep.subr.mxu0 0.0
        %489 = vmatpush1.msra.mxu0 0.0
        %490 = vmatprep.subr.mxu0 0.0
        %491 = vmatpush1.msra.mxu0 0.0
        %492 = vmatprep.subr.mxu0 0.0
        %493 = vmatpush1.msra.mxu0 0.0
        %494 = vmatprep.subr.mxu0 0.0
        %495 = vmatpush1.msra.mxu0 0.0
        %496 = vmatprep.subr.mxu0 0.0
        %497 = vmatpush1.msra.mxu0 0.0
        %498 = vmatprep.subr.mxu0 0.0
        %499 = vmatpush1.msra.mxu0 0.0
        %500 = vmatprep.subr.mxu0 0.0
        %501 = vmatpush1.msra.mxu0 0.0
        %502 = vmatprep.subr.mxu0 0.0
        %503 = vmatpush1.msra.mxu0 0.0
        %504 = vmatprep.subr.mxu0 0.0
        %505 = vmatpush1.msra.mxu0 0.0
        %506 = vmatprep.subr.mxu0 0.0
        %507 = vmatpush1.msra.mxu0 0.0
        %508 = vmatprep.subr.mxu0 0.0
        %509 = vmatpush1.msra.mxu0 0.0
        %510 = vmatprep.subr.mxu0 0.0
        %511 = vmatpush1.msra.mxu0 0.0
        %512 = vmatprep.subr.mxu0 0.0
        %513 = vmatpush1.msra.mxu0 0.0
        %514 = vmatprep.mubr.f32.mxu0 0.0
        %515 = vmatmul.mubr.f32.gmra.mrb[0].mxu0 %v448
        %v516 = vpop.f32.mrb[0].mxu0
        %v517 = vadd.f32 0.0, %v516
        %v518 = vpop.f32.mrb[0].mxu0
        %519 = vdwg.mxu0
        %v520 = vadd.f32 %v442, %v517
        %v521 = vtanh.pop %v520
        %v522 = vxor.u32 %v520, 2147483648
        %v523 = vmul.f32 %v522, 1.442695
        %v524 = vpow.pop %v523
        %v525 = vadd.f32 %v524, 1.0
        %v526 = vrcp.pop %v525
        %v527 = vmul.f32 1.0, %v526
        %v528 = vsel %vm441, %v521, %v527
        %v529 = vmul.f32 %v528, 0.0
        %531 = vrot.lane.b32.xlu0 %v528, 64
        %v532 = vpop.permute.xlu0 %531
        %v534 = vmul.f32 %v528, %v532
        %536 = vrot.lane.b32.xlu0 %v534, 32
        %v537 = vpop.permute.xlu0 %536
        %v539 = vadd.f32 %v529, %v537
        %v540 = vtanh.pop %v539
        %542 = vrot.lane.b32.xlu0 %v540, 64
        %v543 = vpop.permute.xlu0 %542
        %v545 = vmul.f32 %v528, %v543
        %547 = vrot.lane.b32.xlu0 %v545, 32
        %v548 = vpop.permute.xlu0 %547
        %550 = vst.msk [vmem:[#allocation4] sm:$0x1] %vm285, %v548
        %v551 = vld [vmem:[#allocation3 + $0x1] sm:$0x1]
        %v552 = vld [vmem:[#allocation7] sm:$0xff]
        %v553 = vld [vmem:[#allocation7 + $0x8] sm:$0xff]
        %v554 = vld [vmem:[#allocation7 + $0x10] sm:$0xff]
        %v555 = vld [vmem:[#allocation7 + $0x18] sm:$0xff]
        %v556 = vsel %vm362, %v548, 0
        %558 = vmatprep.subr.mxu0 0.0
        %559 = vmatpush1.msra.mxu0 %v552
        %560 = vmatprep.subr.mxu0 0.0
        %561 = vmatpush1.msra.mxu0 %v553
        %562 = vmatprep.subr.mxu0 0.0
        %563 = vmatpush1.msra.mxu0 %v554
        %564 = vmatprep.subr.mxu0 0.0
        %565 = vmatpush1.msra.mxu0 %v555
        %566 = vmatprep.subr.mxu0 0.0
        %567 = vmatpush1.msra.mxu0 0.0
        %568 = vmatprep.subr.mxu0 0.0
        %569 = vmatpush1.msra.mxu0 0.0
        %570 = vmatprep.subr.mxu0 0.0
        %571 = vmatpush1.msra.mxu0 0.0
        %572 = vmatprep.subr.mxu0 0.0
        %573 = vmatpush1.msra.mxu0 0.0
        %574 = vmatprep.subr.mxu0 0.0
        %575 = vmatpush1.msra.mxu0 0.0
        %576 = vmatprep.subr.mxu0 0.0
        %577 = vmatpush1.msra.mxu0 0.0
        %578 = vmatprep.subr.mxu0 0.0
        %579 = vmatpush1.msra.mxu0 0.0
        %580 = vmatprep.subr.mxu0 0.0
        %581 = vmatpush1.msra.mxu0 0.0
        %582 = vmatprep.subr.mxu0 0.0
        %583 = vmatpush1.msra.mxu0 0.0
        %584 = vmatprep.subr.mxu0 0.0
        %585 = vmatpush1.msra.mxu0 0.0
        %586 = vmatprep.subr.mxu0 0.0
        %587 = vmatpush1.msra.mxu0 0.0
        %588 = vmatprep.subr.mxu0 0.0
        %589 = vmatpush1.msra.mxu0 0.0
        %590 = vmatprep.subr.mxu0 0.0
        %591 = vmatpush1.msra.mxu0 0.0
        %592 = vmatprep.subr.mxu0 0.0
        %593 = vmatpush1.msra.mxu0 0.0
        %594 = vmatprep.subr.mxu0 0.0
        %595 = vmatpush1.msra.mxu0 0.0
        %596 = vmatprep.subr.mxu0 0.0
        %597 = vmatpush1.msra.mxu0 0.0
        %598 = vmatprep.subr.mxu0 0.0
        %599 = vmatpush1.msra.mxu0 0.0
        %600 = vmatprep.subr.mxu0 0.0
        %601 = vmatpush1.msra.mxu0 0.0
        %602 = vmatprep.subr.mxu0 0.0
        %603 = vmatpush1.msra.mxu0 0.0
        %604 = vmatprep.subr.mxu0 0.0
        %605 = vmatpush1.msra.mxu0 0.0
        %606 = vmatprep.subr.mxu0 0.0
        %607 = vmatpush1.msra.mxu0 0.0
        %608 = vmatprep.subr.mxu0 0.0
        %609 = vmatpush1.msra.mxu0 0.0
        %610 = vmatprep.subr.mxu0 0.0
        %611 = vmatpush1.msra.mxu0 0.0
        %612 = vmatprep.subr.mxu0 0.0
        %613 = vmatpush1.msra.mxu0 0.0
        %614 = vmatprep.subr.mxu0 0.0
        %615 = vmatpush1.msra.mxu0 0.0
        %616 = vmatprep.subr.mxu0 0.0
        %617 = vmatpush1.msra.mxu0 0.0
        %618 = vmatprep.subr.mxu0 0.0
        %619 = vmatpush1.msra.mxu0 0.0
        %620 = vmatprep.subr.mxu0 0.0
        %621 = vmatpush1.msra.mxu0 0.0
        %622 = vmatprep.mubr.f32.mxu0 0.0
        %623 = vmatmul.mubr.f32.gmra.mrb[0].mxu0 %v556
        %v624 = vpop.f32.mrb[0].mxu0
        %v625 = vadd.f32 0.0, %v624
        %v626 = vpop.f32.mrb[0].mxu0
        %627 = vdwg.mxu0
        %v628 = vadd.f32 %v551, %v625
        %v629 = vtanh.pop %v628
        %v630 = vxor.u32 %v628, 2147483648
        %v631 = vmul.f32 %v630, 1.442695
        %v632 = vpow.pop %v631
        %v633 = vadd.f32 %v632, 1.0
        %v634 = vrcp.pop %v633
        %v635 = vmul.f32 1.0, %v634
        %v636 = vsel %vm441, %v629, %v635
        %v637 = vmul.f32 %v636, %v539
        %639 = vrot.lane.b32.xlu0 %v636, 64
        %v640 = vpop.permute.xlu0 %639
        %v642 = vmul.f32 %v636, %v640
        %644 = vrot.lane.b32.xlu0 %v642, 32
        %v645 = vpop.permute.xlu0 %644
        %v647 = vadd.f32 %v637, %v645
        %v648 = vtanh.pop %v647
        %650 = vrot.lane.b32.xlu0 %v648, 64
        %v651 = vpop.permute.xlu0 %650
        %v653 = vmul.f32 %v636, %v651
        %655 = vrot.lane.b32.xlu0 %v653, 32
        %v656 = vpop.permute.xlu0 %655
        %658 = vst.msk [vmem:[#allocation4 + $0x1] sm:$0x1] %vm285, %v656
        %v659 = vld [vmem:[#allocation3 + $0x2] sm:$0x1]
        %v660 = vld [vmem:[#allocation7] sm:$0xff]
        %v661 = vld [vmem:[#allocation7 + $0x8] sm:$0xff]
        %v662 = vld [vmem:[#allocation7 + $0x10] sm:$0xff]
        %v663 = vld [vmem:[#allocation7 + $0x18] sm:$0xff]
        %v664 = vsel %vm362, %v656, 0
        %666 = vmatprep.subr.mxu0 0.0
        %667 = vmatpush1.msra.mxu0 %v660
        %668 = vmatprep.subr.mxu0 0.0
        %669 = vmatpush1.msra.mxu0 %v661
        %670 = vmatprep.subr.mxu0 0.0
        %671 = vmatpush1.msra.mxu0 %v662
        %672 = vmatprep.subr.mxu0 0.0
        %673 = vmatpush1.msra.mxu0 %v663
        %674 = vmatprep.subr.mxu0 0.0
        %675 = vmatpush1.msra.mxu0 0.0
        %676 = vmatprep.subr.mxu0 0.0
        %677 = vmatpush1.msra.mxu0 0.0
        %678 = vmatprep.subr.mxu0 0.0
        %679 = vmatpush1.msra.mxu0 0.0
        %680 = vmatprep.subr.mxu0 0.0
        %681 = vmatpush1.msra.mxu0 0.0
        %682 = vmatprep.subr.mxu0 0.0
        %683 = vmatpush1.msra.mxu0 0.0
        %684 = vmatprep.subr.mxu0 0.0
        %685 = vmatpush1.msra.mxu0 0.0
        %686 = vmatprep.subr.mxu0 0.0
        %687 = vmatpush1.msra.mxu0 0.0
        %688 = vmatprep.subr.mxu0 0.0
        %689 = vmatpush1.msra.mxu0 0.0
        %690 = vmatprep.subr.mxu0 0.0
        %691 = vmatpush1.msra.mxu0 0.0
        %692 = vmatprep.subr.mxu0 0.0
        %693 = vmatpush1.msra.mxu0 0.0
        %694 = vmatprep.subr.mxu0 0.0
        %695 = vmatpush1.msra.mxu0 0.0
        %696 = vmatprep.subr.mxu0 0.0
        %697 = vmatpush1.msra.mxu0 0.0
        %698 = vmatprep.subr.mxu0 0.0
        %699 = vmatpush1.msra.mxu0 0.0
        %700 = vmatprep.subr.mxu0 0.0
        %701 = vmatpush1.msra.mxu0 0.0
        %702 = vmatprep.subr.mxu0 0.0
        %703 = vmatpush1.msra.mxu0 0.0
        %704 = vmatprep.subr.mxu0 0.0
        %705 = vmatpush1.msra.mxu0 0.0
        %706 = vmatprep.subr.mxu0 0.0
        %707 = vmatpush1.msra.mxu0 0.0
        %708 = vmatprep.subr.mxu0 0.0
        %709 = vmatpush1.msra.mxu0 0.0
        %710 = vmatprep.subr.mxu0 0.0
        %711 = vmatpush1.msra.mxu0 0.0
        %712 = vmatprep.subr.mxu0 0.0
        %713 = vmatpush1.msra.mxu0 0.0
        %714 = vmatprep.subr.mxu0 0.0
        %715 = vmatpush1.msra.mxu0 0.0
        %716 = vmatprep.subr.mxu0 0.0
        %717 = vmatpush1.msra.mxu0 0.0
        %718 = vmatprep.subr.mxu0 0.0
        %719 = vmatpush1.msra.mxu0 0.0
        %720 = vmatprep.subr.mxu0 0.0
        %721 = vmatpush1.msra.mxu0 0.0
        %722 = vmatprep.subr.mxu0 0.0
        %723 = vmatpush1.msra.mxu0 0.0
        %724 = vmatprep.subr.mxu0 0.0
        %725 = vmatpush1.msra.mxu0 0.0
        %726 = vmatprep.subr.mxu0 0.0
        %727 = vmatpush1.msra.mxu0 0.0
        %728 = vmatprep.subr.mxu0 0.0
        %729 = vmatpush1.msra.mxu0 0.0
        %730 = vmatprep.mubr.f32.mxu0 0.0
        %731 = vmatmul.mubr.f32.gmra.mrb[0].mxu0 %v664
        %v732 = vpop.f32.mrb[0].mxu0
        %v733 = vadd.f32 0.0, %v732
        %v734 = vpop.f32.mrb[0].mxu0
        %735 = vdwg.mxu0
        %v736 = vadd.f32 %v659, %v733
        %v737 = vtanh.pop %v736
        %v738 = vxor.u32 %v736, 2147483648
        %v739 = vmul.f32 %v738, 1.442695
        %v740 = vpow.pop %v739
        %v741 = vadd.f32 %v740, 1.0
        %v742 = vrcp.pop %v741
        %v743 = vmul.f32 1.0, %v742
        %v744 = vsel %vm441, %v737, %v743
        %v745 = vmul.f32 %v744, %v647
        %747 = vrot.lane.b32.xlu0 %v744, 64
        %v748 = vpop.permute.xlu0 %747
        %v750 = vmul.f32 %v744, %v748
        %752 = vrot.lane.b32.xlu0 %v750, 32
        %v753 = vpop.permute.xlu0 %752
        %v755 = vadd.f32 %v745, %v753
        %v756 = vtanh.pop %v755
        %758 = vrot.lane.b32.xlu0 %v756, 64
        %v759 = vpop.permute.xlu0 %758
        %v761 = vmul.f32 %v744, %v759
        %763 = vrot.lane.b32.xlu0 %v761, 32
        %v764 = vpop.permute.xlu0 %763
        %766 = vst.msk [vmem:[#allocation4 + $0x2] sm:$0x1] %vm285, %v764
        %v767 = vld [vmem:[#allocation3 + $0x3] sm:$0x1]
        %v768 = vld [vmem:[#allocation7] sm:$0xff]
        %v769 = vld [vmem:[#allocation7 + $0x8] sm:$0xff]
        %v770 = vld [vmem:[#allocation7 + $0x10] sm:$0xff]
        %v771 = vld [vmem:[#allocation7 + $0x18] sm:$0xff]
        %v772 = vsel %vm362, %v764, 0
        %774 = vmatprep.subr.mxu0 0.0
        %775 = vmatpush1.msra.mxu0 %v768
        %776 = vmatprep.subr.mxu0 0.0
        %777 = vmatpush1.msra.mxu0 %v769
        %778 = vmatprep.subr.mxu0 0.0
        %779 = vmatpush1.msra.mxu0 %v770
        %780 = vmatprep.subr.mxu0 0.0
        %781 = vmatpush1.msra.mxu0 %v771
        %782 = vmatprep.subr.mxu0 0.0
        %783 = vmatpush1.msra.mxu0 0.0
        %784 = vmatprep.subr.mxu0 0.0
        %785 = vmatpush1.msra.mxu0 0.0
        %786 = vmatprep.subr.mxu0 0.0
        %787 = vmatpush1.msra.mxu0 0.0
        %788 = vmatprep.subr.mxu0 0.0
        %789 = vmatpush1.msra.mxu0 0.0
        %790 = vmatprep.subr.mxu0 0.0
        %791 = vmatpush1.msra.mxu0 0.0
        %792 = vmatprep.subr.mxu0 0.0
        %793 = vmatpush1.msra.mxu0 0.0
        %794 = vmatprep.subr.mxu0 0.0
        %795 = vmatpush1.msra.mxu0 0.0
        %796 = vmatprep.subr.mxu0 0.0
        %797 = vmatpush1.msra.mxu0 0.0
        %798 = vmatprep.subr.mxu0 0.0
        %799 = vmatpush1.msra.mxu0 0.0
        %800 = vmatprep.subr.mxu0 0.0
        %801 = vmatpush1.msra.mxu0 0.0
        %802 = vmatprep.subr.mxu0 0.0
        %803 = vmatpush1.msra.mxu0 0.0
        %804 = vmatprep.subr.mxu0 0.0
        %805 = vmatpush1.msra.mxu0 0.0
        %806 = vmatprep.subr.mxu0 0.0
        %807 = vmatpush1.msra.mxu0 0.0
        %808 = vmatprep.subr.mxu0 0.0
        %809 = vmatpush1.msra.mxu0 0.0
        %810 = vmatprep.subr.mxu0 0.0
        %811 = vmatpush1.msra.mxu0 0.0
        %812 = vmatprep.subr.mxu0 0.0
        %813 = vmatpush1.msra.mxu0 0.0
        %814 = vmatprep.subr.mxu0 0.0
        %815 = vmatpush1.msra.mxu0 0.0
        %816 = vmatprep.subr.mxu0 0.0
        %817 = vmatpush1.msra.mxu0 0.0
        %818 = vmatprep.subr.mxu0 0.0
        %819 = vmatpush1.msra.mxu0 0.0
        %820 = vmatprep.subr.mxu0 0.0
        %821 = vmatpush1.msra.mxu0 0.0
        %822 = vmatprep.subr.mxu0 0.0
        %823 = vmatpush1.msra.mxu0 0.0
        %824 = vmatprep.subr.mxu0 0.0
        %825 = vmatpush1.msra.mxu0 0.0
        %826 = vmatprep.subr.mxu0 0.0
        %827 = vmatpush1.msra.mxu0 0.0
        %828 = vmatprep.subr.mxu0 0.0
        %829 = vmatpush1.msra.mxu0 0.0
        %830 = vmatprep.subr.mxu0 0.0
        %831 = vmatpush1.msra.mxu0 0.0
        %832 = vmatprep.subr.mxu0 0.0
        %833 = vmatpush1.msra.mxu0 0.0
        %834 = vmatprep.subr.mxu0 0.0
        %835 = vmatpush1.msra.mxu0 0.0
        %836 = vmatprep.subr.mxu0 0.0
        %837 = vmatpush1.msra.mxu0 0.0
        %838 = vmatprep.mubr.f32.mxu0 0.0
        %839 = vmatmul.mubr.f32.gmra.mrb[0].mxu0 %v772
        %v840 = vpop.f32.mrb[0].mxu0
        %v841 = vadd.f32 0.0, %v840
        %v842 = vpop.f32.mrb[0].mxu0
        %843 = vdwg.mxu0
        %v844 = vadd.f32 %v767, %v841
        %v845 = vtanh.pop %v844
        %v846 = vxor.u32 %v844, 2147483648
        %v847 = vmul.f32 %v846, 1.442695
        %v848 = vpow.pop %v847
        %v849 = vadd.f32 %v848, 1.0
        %v850 = vrcp.pop %v849
        %v851 = vmul.f32 1.0, %v850
        %v852 = vsel %vm441, %v845, %v851
        %v853 = vmul.f32 %v852, %v755
        %855 = vrot.lane.b32.xlu0 %v852, 64
        %v856 = vpop.permute.xlu0 %855
        %v858 = vmul.f32 %v852, %v856
        %860 = vrot.lane.b32.xlu0 %v858, 32
        %v861 = vpop.permute.xlu0 %860
        %v863 = vadd.f32 %v853, %v861
        %v864 = vtanh.pop %v863
        %866 = vrot.lane.b32.xlu0 %v864, 64
        %v867 = vpop.permute.xlu0 %866
        %v869 = vmul.f32 %v852, %v867
        %871 = vrot.lane.b32.xlu0 %v869, 32
        %v872 = vpop.permute.xlu0 %871
        %874 = vst.msk [vmem:[#allocation4 + $0x3] sm:$0x1] %vm285, %v872
        %v875 = vld [vmem:[#allocation3 + $0x4] sm:$0x1]
        %v876 = vld [vmem:[#allocation7] sm:$0xff]
        %v877 = vld [vmem:[#allocation7 + $0x8] sm:$0xff]
        %v878 = vld [vmem:[#allocation7 + $0x10] sm:$0xff]
        %v879 = vld [vmem:[#allocation7 + $0x18] sm:$0xff]
        %v880 = vsel %vm362, %v872, 0
        %882 = vmatprep.subr.mxu0 0.0
        %883 = vmatpush1.msra.mxu0 %v876
        %884 = vmatprep.subr.mxu0 0.0
        %885 = vmatpush1.msra.mxu0 %v877
        %886 = vmatprep.subr.mxu0 0.0
        %887 = vmatpush1.msra.mxu0 %v878
        %888 = vmatprep.subr.mxu0 0.0
        %889 = vmatpush1.msra.mxu0 %v879
        %890 = vmatprep.subr.mxu0 0.0
        %891 = vmatpush1.msra.mxu0 0.0
        %892 = vmatprep.subr.mxu0 0.0
        %893 = vmatpush1.msra.mxu0 0.0
        %894 = vmatprep.subr.mxu0 0.0
        %895 = vmatpush1.msra.mxu0 0.0
        %896 = vmatprep.subr.mxu0 0.0
        %897 = vmatpush1.msra.mxu0 0.0
        %898 = vmatprep.subr.mxu0 0.0
        %899 = vmatpush1.msra.mxu0 0.0
        %900 = vmatprep.subr.mxu0 0.0
        %901 = vmatpush1.msra.mxu0 0.0
        %902 = vmatprep.subr.mxu0 0.0
        %903 = vmatpush1.msra.mxu0 0.0
        %904 = vmatprep.subr.mxu0 0.0
        %905 = vmatpush1.msra.mxu0 0.0
        %906 = vmatprep.subr.mxu0 0.0
        %907 = vmatpush1.msra.mxu0 0.0
        %908 = vmatprep.subr.mxu0 0.0
        %909 = vmatpush1.msra.mxu0 0.0
        %910 = vmatprep.subr.mxu0 0.0
        %911 = vmatpush1.msra.mxu0 0.0
        %912 = vmatprep.subr.mxu0 0.0
        %913 = vmatpush1.msra.mxu0 0.0
        %914 = vmatprep.subr.mxu0 0.0
        %915 = vmatpush1.msra.mxu0 0.0
        %916 = vmatprep.subr.mxu0 0.0
        %917 = vmatpush1.msra.mxu0 0.0
        %918 = vmatprep.subr.mxu0 0.0
        %919 = vmatpush1.msra.mxu0 0.0
        %920 = vmatprep.subr.mxu0 0.0
        %921 = vmatpush1.msra.mxu0 0.0
        %922 = vmatprep.subr.mxu0 0.0
        %923 = vmatpush1.msra.mxu0 0.0
        %924 = vmatprep.subr.mxu0 0.0
        %925 = vmatpush1.msra.mxu0 0.0
        %926 = vmatprep.subr.mxu0 0.0
        %927 = vmatpush1.msra.mxu0 0.0
        %928 = vmatprep.subr.mxu0 0.0
        %929 = vmatpush1.msra.mxu0 0.0
        %930 = vmatprep.subr.mxu0 0.0
        %931 = vmatpush1.msra.mxu0 0.0
        %932 = vmatprep.subr.mxu0 0.0
        %933 = vmatpush1.msra.mxu0 0.0
        %934 = vmatprep.subr.mxu0 0.0
        %935 = vmatpush1.msra.mxu0 0.0
        %936 = vmatprep.subr.mxu0 0.0
        %937 = vmatpush1.msra.mxu0 0.0
        %938 = vmatprep.subr.mxu0 0.0
        %939 = vmatpush1.msra.mxu0 0.0
        %940 = vmatprep.subr.mxu0 0.0
        %941 = vmatpush1.msra.mxu0 0.0
        %942 = vmatprep.subr.mxu0 0.0
        %943 = vmatpush1.msra.mxu0 0.0
        %944 = vmatprep.subr.mxu0 0.0
        %945 = vmatpush1.msra.mxu0 0.0
        %946 = vmatprep.mubr.f32.mxu0 0.0
        %947 = vmatmul.mubr.f32.gmra.mrb[0].mxu0 %v880
        %v948 = vpop.f32.mrb[0].mxu0
        %v949 = vadd.f32 0.0, %v948
        %v950 = vpop.f32.mrb[0].mxu0
        %951 = vdwg.mxu0
        %v952 = vadd.f32 %v875, %v949
        %v953 = vtanh.pop %v952
        %v954 = vxor.u32 %v952, 2147483648
        %v955 = vmul.f32 %v954, 1.442695
        %v956 = vpow.pop %v955
        %v957 = vadd.f32 %v956, 1.0
        %v958 = vrcp.pop %v957
        %v959 = vmul.f32 1.0, %v958
        %v960 = vsel %vm441, %v953, %v959
        %v961 = vmul.f32 %v960, %v863
        %963 = vrot.lane.b32.xlu0 %v960, 64
        %v964 = vpop.permute.xlu0 %963
        %v966 = vmul.f32 %v960, %v964
        %968 = vrot.lane.b32.xlu0 %v966, 32
        %v969 = vpop.permute.xlu0 %968
        %v971 = vadd.f32 %v961, %v969
        %v972 = vtanh.pop %v971
        %974 = vrot.lane.b32.xlu0 %v972, 64
        %v975 = vpop.permute.xlu0 %974
        %v977 = vmul.f32 %v960, %v975
        %979 = vrot.lane.b32.xlu0 %v977, 32
        %v980 = vpop.permute.xlu0 %979
        %982 = vst.msk [vmem:[#allocation4 + $0x4] sm:$0x1] %vm285, %v980
        %v983 = vld [vmem:[#allocation3 + $0x5] sm:$0x1]
        %v984 = vld [vmem:[#allocation7] sm:$0xff]
        %v985 = vld [vmem:[#allocation7 + $0x8] sm:$0xff]
        %v986 = vld [vmem:[#allocation7 + $0x10] sm:$0xff]
        %v987 = vld [vmem:[#allocation7 + $0x18] sm:$0xff]
        %v988 = vsel %vm362, %v980, 0
        %990 = vmatprep.subr.mxu0 0.0
        %991 = vmatpush1.msra.mxu0 %v984
        %992 = vmatprep.subr.mxu0 0.0
        %993 = vmatpush1.msra.mxu0 %v985
        %994 = vmatprep.subr.mxu0 0.0
        %995 = vmatpush1.msra.mxu0 %v986
        %996 = vmatprep.subr.mxu0 0.0
        %997 = vmatpush1.msra.mxu0 %v987
        %998 = vmatprep.subr.mxu0 0.0
        %999 = vmatpush1.msra.mxu0 0.0
        %1000 = vmatprep.subr.mxu0 0.0
        %1001 = vmatpush1.msra.mxu0 0.0
        %1002 = vmatprep.subr.mxu0 0.0
        %1003 = vmatpush1.msra.mxu0 0.0
        %1004 = vmatprep.subr.mxu0 0.0
        %1005 = vmatpush1.msra.mxu0 0.0
        %1006 = vmatprep.subr.mxu0 0.0
        %1007 = vmatpush1.msra.mxu0 0.0
        %1008 = vmatprep.subr.mxu0 0.0
        %1009 = vmatpush1.msra.mxu0 0.0
        %1010 = vmatprep.subr.mxu0 0.0
        %1011 = vmatpush1.msra.mxu0 0.0
        %1012 = vmatprep.subr.mxu0 0.0
        %1013 = vmatpush1.msra.mxu0 0.0
        %1014 = vmatprep.subr.mxu0 0.0
        %1015 = vmatpush1.msra.mxu0 0.0
        %1016 = vmatprep.subr.mxu0 0.0
        %1017 = vmatpush1.msra.mxu0 0.0
        %1018 = vmatprep.subr.mxu0 0.0
        %1019 = vmatpush1.msra.mxu0 0.0
        %1020 = vmatprep.subr.mxu0 0.0
        %1021 = vmatpush1.msra.mxu0 0.0
        %1022 = vmatprep.subr.mxu0 0.0
        %1023 = vmatpush1.msra.mxu0 0.0
        %1024 = vmatprep.subr.mxu0 0.0
        %1025 = vmatpush1.msra.mxu0 0.0
        %1026 = vmatprep.subr.mxu0 0.0
        %1027 = vmatpush1.msra.mxu0 0.0
        %1028 = vmatprep.subr.mxu0 0.0
        %1029 = vmatpush1.msra.mxu0 0.0
        %1030 = vmatprep.subr.mxu0 0.0
        %1031 = vmatpush1.msra.mxu0 0.0
        %1032 = vmatprep.subr.mxu0 0.0
        %1033 = vmatpush1.msra.mxu0 0.0
        %1034 = vmatprep.subr.mxu0 0.0
        %1035 = vmatpush1.msra.mxu0 0.0
        %1036 = vmatprep.subr.mxu0 0.0
        %1037 = vmatpush1.msra.mxu0 0.0
        %1038 = vmatprep.subr.mxu0 0.0
        %1039 = vmatpush1.msra.mxu0 0.0
        %1040 = vmatprep.subr.mxu0 0.0
        %1041 = vmatpush1.msra.mxu0 0.0
        %1042 = vmatprep.subr.mxu0 0.0
        %1043 = vmatpush1.msra.mxu0 0.0
        %1044 = vmatprep.subr.mxu0 0.0
        %1045 = vmatpush1.msra.mxu0 0.0
        %1046 = vmatprep.subr.mxu0 0.0
        %1047 = vmatpush1.msra.mxu0 0.0
        %1048 = vmatprep.subr.mxu0 0.0
        %1049 = vmatpush1.msra.mxu0 0.0
        %1050 = vmatprep.subr.mxu0 0.0
        %1051 = vmatpush1.msra.mxu0 0.0
        %1052 = vmatprep.subr.mxu0 0.0
        %1053 = vmatpush1.msra.mxu0 0.0
        %1054 = vmatprep.mubr.f32.mxu0 0.0
        %1055 = vmatmul.mubr.f32.gmra.mrb[0].mxu0 %v988
        %v1056 = vpop.f32.mrb[0].mxu0
        %v1057 = vadd.f32 0.0, %v1056
        %v1058 = vpop.f32.mrb[0].mxu0
        %1059 = vdwg.mxu0
        %v1060 = vadd.f32 %v983, %v1057
        %v1061 = vtanh.pop %v1060
        %v1062 = vxor.u32 %v1060, 2147483648
        %v1063 = vmul.f32 %v1062, 1.442695
        %v1064 = vpow.pop %v1063
        %v1065 = vadd.f32 %v1064, 1.0
        %v1066 = vrcp.pop %v1065
        %v1067 = vmul.f32 1.0, %v1066
        %v1068 = vsel %vm441, %v1061, %v1067
        %v1069 = vmul.f32 %v1068, %v971
        %1071 = vrot.lane.b32.xlu0 %v1068, 64
        %v1072 = vpop.permute.xlu0 %1071
        %v1074 = vmul.f32 %v1068, %v1072
        %1076 = vrot.lane.b32.xlu0 %v1074, 32
        %v1077 = vpop.permute.xlu0 %1076
        %v1079 = vadd.f32 %v1069, %v1077
        %v1080 = vtanh.pop %v1079
        %1082 = vrot.lane.b32.xlu0 %v1080, 64
        %v1083 = vpop.permute.xlu0 %1082
        %v1085 = vmul.f32 %v1068, %v1083
        %1087 = vrot.lane.b32.xlu0 %v1085, 32
        %v1088 = vpop.permute.xlu0 %1087
        %1090 = vst.msk [vmem:[#allocation4 + $0x5] sm:$0x1] %vm285, %v1088
        %v1091 = vld [vmem:[#allocation3 + $0x6] sm:$0x1]
        %v1092 = vld [vmem:[#allocation7] sm:$0xff]
        %v1093 = vld [vmem:[#allocation7 + $0x8] sm:$0xff]
        %v1094 = vld [vmem:[#allocation7 + $0x10] sm:$0xff]
        %v1095 = vld [vmem:[#allocation7 + $0x18] sm:$0xff]
        %v1096 = vsel %vm362, %v1088, 0
        %1098 = vmatprep.subr.mxu0 0.0
        %1099 = vmatpush1.msra.mxu0 %v1092
        %1100 = vmatprep.subr.mxu0 0.0
        %1101 = vmatpush1.msra.mxu0 %v1093
        %1102 = vmatprep.subr.mxu0 0.0
        %1103 = vmatpush1.msra.mxu0 %v1094
        %1104 = vmatprep.subr.mxu0 0.0
        %1105 = vmatpush1.msra.mxu0 %v1095
        %1106 = vmatprep.subr.mxu0 0.0
        %1107 = vmatpush1.msra.mxu0 0.0
        %1108 = vmatprep.subr.mxu0 0.0
        %1109 = vmatpush1.msra.mxu0 0.0
        %1110 = vmatprep.subr.mxu0 0.0
        %1111 = vmatpush1.msra.mxu0 0.0
        %1112 = vmatprep.subr.mxu0 0.0
        %1113 = vmatpush1.msra.mxu0 0.0
        %1114 = vmatprep.subr.mxu0 0.0
        %1115 = vmatpush1.msra.mxu0 0.0
        %1116 = vmatprep.subr.mxu0 0.0
        %1117 = vmatpush1.msra.mxu0 0.0
        %1118 = vmatprep.subr.mxu0 0.0
        %1119 = vmatpush1.msra.mxu0 0.0
        %1120 = vmatprep.subr.mxu0 0.0
        %1121 = vmatpush1.msra.mxu0 0.0
        %1122 = vmatprep.subr.mxu0 0.0
        %1123 = vmatpush1.msra.mxu0 0.0
        %1124 = vmatprep.subr.mxu0 0.0
        %1125 = vmatpush1.msra.mxu0 0.0
        %1126 = vmatprep.subr.mxu0 0.0
        %1127 = vmatpush1.msra.mxu0 0.0
        %1128 = vmatprep.subr.mxu0 0.0
        %1129 = vmatpush1.msra.mxu0 0.0
        %1130 = vmatprep.subr.mxu0 0.0
        %1131 = vmatpush1.msra.mxu0 0.0
        %1132 = vmatprep.subr.mxu0 0.0
        %1133 = vmatpush1.msra.mxu0 0.0
        %1134 = vmatprep.subr.mxu0 0.0
        %1135 = vmatpush1.msra.mxu0 0.0
        %1136 = vmatprep.subr.mxu0 0.0
        %1137 = vmatpush1.msra.mxu0 0.0
        %1138 = vmatprep.subr.mxu0 0.0
        %1139 = vmatpush1.msra.mxu0 0.0
        %1140 = vmatprep.subr.mxu0 0.0
        %1141 = vmatpush1.msra.mxu0 0.0
        %1142 = vmatprep.subr.mxu0 0.0
        %1143 = vmatpush1.msra.mxu0 0.0
        %1144 = vmatprep.subr.mxu0 0.0
        %1145 = vmatpush1.msra.mxu0 0.0
        %1146 = vmatprep.subr.mxu0 0.0
        %1147 = vmatpush1.msra.mxu0 0.0
        %1148 = vmatprep.subr.mxu0 0.0
        %1149 = vmatpush1.msra.mxu0 0.0
        %1150 = vmatprep.subr.mxu0 0.0
        %1151 = vmatpush1.msra.mxu0 0.0
        %1152 = vmatprep.subr.mxu0 0.0
        %1153 = vmatpush1.msra.mxu0 0.0
        %1154 = vmatprep.subr.mxu0 0.0
        %1155 = vmatpush1.msra.mxu0 0.0
        %1156 = vmatprep.subr.mxu0 0.0
        %1157 = vmatpush1.msra.mxu0 0.0
        %1158 = vmatprep.subr.mxu0 0.0
        %1159 = vmatpush1.msra.mxu0 0.0
        %1160 = vmatprep.subr.mxu0 0.0
        %1161 = vmatpush1.msra.mxu0 0.0
        %1162 = vmatprep.mubr.f32.mxu0 0.0
        %1163 = vmatmul.mubr.f32.gmra.mrb[0].mxu0 %v1096
        %v1164 = vpop.f32.mrb[0].mxu0
        %v1165 = vadd.f32 0.0, %v1164
        %v1166 = vpop.f32.mrb[0].mxu0
        %1167 = vdwg.mxu0
        %v1168 = vadd.f32 %v1091, %v1165
        %v1169 = vtanh.pop %v1168
        %v1170 = vxor.u32 %v1168, 2147483648
        %v1171 = vmul.f32 %v1170, 1.442695
        %v1172 = vpow.pop %v1171
        %v1173 = vadd.f32 %v1172, 1.0
        %v1174 = vrcp.pop %v1173
        %v1175 = vmul.f32 1.0, %v1174
        %v1176 = vsel %vm441, %v1169, %v1175
        %v1177 = vmul.f32 %v1176, %v1079
        %1179 = vrot.lane.b32.xlu0 %v1176, 64
        %v1180 = vpop.permute.xlu0 %1179
        %v1182 = vmul.f32 %v1176, %v1180
        %1184 = vrot.lane.b32.xlu0 %v1182, 32
        %v1185 = vpop.permute.xlu0 %1184
        %v1187 = vadd.f32 %v1177, %v1185
        %v1188 = vtanh.pop %v1187
        %1190 = vrot.lane.b32.xlu0 %v1188, 64
        %v1191 = vpop.permute.xlu0 %1190
        %v1193 = vmul.f32 %v1176, %v1191
        %1195 = vrot.lane.b32.xlu0 %v1193, 32
        %v1196 = vpop.permute.xlu0 %1195
        %1198 = vst.msk [vmem:[#allocation4 + $0x6] sm:$0x1] %vm285, %v1196
        %v1199 = vld [vmem:[#allocation3 + $0x7] sm:$0x1]
        %v1200 = vld [vmem:[#allocation7] sm:$0xff]
        %v1201 = vld [vmem:[#allocation7 + $0x8] sm:$0xff]
        %v1202 = vld [vmem:[#allocation7 + $0x10] sm:$0xff]
        %v1203 = vld [vmem:[#allocation7 + $0x18] sm:$0xff]
        %v1204 = vsel %vm362, %v1196, 0
        %1206 = vmatprep.subr.mxu0 0.0
        %1207 = vmatpush1.msra.mxu0 %v1200
        %1208 = vmatprep.subr.mxu0 0.0
        %1209 = vmatpush1.msra.mxu0 %v1201
        %1210 = vmatprep.subr.mxu0 0.0
        %1211 = vmatpush1.msra.mxu0 %v1202
        %1212 = vmatprep.subr.mxu0 0.0
        %1213 = vmatpush1.msra.mxu0 %v1203
        %1214 = vmatprep.subr.mxu0 0.0
        %1215 = vmatpush1.msra.mxu0 0.0
        %1216 = vmatprep.subr.mxu0 0.0
        %1217 = vmatpush1.msra.mxu0 0.0
        %1218 = vmatprep.subr.mxu0 0.0
        %1219 = vmatpush1.msra.mxu0 0.0
        %1220 = vmatprep.subr.mxu0 0.0
        %1221 = vmatpush1.msra.mxu0 0.0
        %1222 = vmatprep.subr.mxu0 0.0
        %1223 = vmatpush1.msra.mxu0 0.0
        %1224 = vmatprep.subr.mxu0 0.0
        %1225 = vmatpush1.msra.mxu0 0.0
        %1226 = vmatprep.subr.mxu0 0.0
        %1227 = vmatpush1.msra.mxu0 0.0
        %1228 = vmatprep.subr.mxu0 0.0
        %1229 = vmatpush1.msra.mxu0 0.0
        %1230 = vmatprep.subr.mxu0 0.0
        %1231 = vmatpush1.msra.mxu0 0.0
        %1232 = vmatprep.subr.mxu0 0.0
        %1233 = vmatpush1.msra.mxu0 0.0
        %1234 = vmatprep.subr.mxu0 0.0
        %1235 = vmatpush1.msra.mxu0 0.0
        %1236 = vmatprep.subr.mxu0 0.0
        %1237 = vmatpush1.msra.mxu0 0.0
        %1238 = vmatprep.subr.mxu0 0.0
        %1239 = vmatpush1.msra.mxu0 0.0
        %1240 = vmatprep.subr.mxu0 0.0
        %1241 = vmatpush1.msra.mxu0 0.0
        %1242 = vmatprep.subr.mxu0 0.0
        %1243 = vmatpush1.msra.mxu0 0.0
        %1244 = vmatprep.subr.mxu0 0.0
        %1245 = vmatpush1.msra.mxu0 0.0
        %1246 = vmatprep.subr.mxu0 0.0
        %1247 = vmatpush1.msra.mxu0 0.0
        %1248 = vmatprep.subr.mxu0 0.0
        %1249 = vmatpush1.msra.mxu0 0.0
        %1250 = vmatprep.subr.mxu0 0.0
        %1251 = vmatpush1.msra.mxu0 0.0
        %1252 = vmatprep.subr.mxu0 0.0
        %1253 = vmatpush1.msra.mxu0 0.0
        %1254 = vmatprep.subr.mxu0 0.0
        %1255 = vmatpush1.msra.mxu0 0.0
        %1256 = vmatprep.subr.mxu0 0.0
        %1257 = vmatpush1.msra.mxu0 0.0
        %1258 = vmatprep.subr.mxu0 0.0
        %1259 = vmatpush1.msra.mxu0 0.0
        %1260 = vmatprep.subr.mxu0 0.0
        %1261 = vmatpush1.msra.mxu0 0.0
        %1262 = vmatprep.subr.mxu0 0.0
        %1263 = vmatpush1.msra.mxu0 0.0
        %1264 = vmatprep.subr.mxu0 0.0
        %1265 = vmatpush1.msra.mxu0 0.0
        %1266 = vmatprep.subr.mxu0 0.0
        %1267 = vmatpush1.msra.mxu0 0.0
        %1268 = vmatprep.subr.mxu0 0.0
        %1269 = vmatpush1.msra.mxu0 0.0
        %1270 = vmatprep.mubr.f32.mxu0 0.0
        %1271 = vmatmul.mubr.f32.gmra.mrb[0].mxu0 %v1204
        %v1272 = vpop.f32.mrb[0].mxu0
        %v1273 = vadd.f32 0.0, %v1272
        %v1274 = vpop.f32.mrb[0].mxu0
        %1275 = vdwg.mxu0
        %v1276 = vadd.f32 %v1199, %v1273
        %v1277 = vtanh.pop %v1276
        %v1278 = vxor.u32 %v1276, 2147483648
        %v1279 = vmul.f32 %v1278, 1.442695
        %v1280 = vpow.pop %v1279
        %v1281 = vadd.f32 %v1280, 1.0
        %v1282 = vrcp.pop %v1281
        %v1283 = vmul.f32 1.0, %v1282
        %v1284 = vsel %vm441, %v1277, %v1283
        %v1285 = vmul.f32 %v1284, %v1187
        %1287 = vrot.lane.b32.xlu0 %v1284, 64
        %v1288 = vpop.permute.xlu0 %1287
        %v1290 = vmul.f32 %v1284, %v1288
        %1292 = vrot.lane.b32.xlu0 %v1290, 32
        %v1293 = vpop.permute.xlu0 %1292
        %v1295 = vadd.f32 %v1285, %v1293
        %v1296 = vtanh.pop %v1295
        %1298 = vrot.lane.b32.xlu0 %v1296, 64
        %v1299 = vpop.permute.xlu0 %1298
        %v1301 = vmul.f32 %v1284, %v1299
        %1303 = vrot.lane.b32.xlu0 %v1301, 32
        %v1304 = vpop.permute.xlu0 %1303
        %1306 = vst.msk [vmem:[#allocation4 + $0x7] sm:$0x1] %vm285, %v1304
        %v1307 = vld [vmem:[#allocation4] sm:$0xff]
        %v1308 = vld [vmem:[%s5] sm:$0xff]
        %v1309 = vld [vmem:[%s5 + $0x8] sm:$0xff]
        %v1310 = vld [vmem:[%s5 + $0x10] sm:$0xff]
        %v1311 = vld [vmem:[%s5 + $0x18] sm:$0xff]
        %v1312 = vld [vmem:[#allocation12] sm:$0x1]
        %v1314 = vlaneseq
        %v1315 = vshrl.u32 %v1314, 7
        %v1316 = vsub.s32 0, %v1315
        %v1317 = vrot.slane %v1312, %v1316
        %v1320 = vsel %vm362, %v1307, 0
        %1322 = vmatprep.subr.mxu0 0.0
        %1323 = vmatpush1.msra.mxu0 %v1308
        %1324 = vmatprep.subr.mxu0 0.0
        %1325 = vmatpush1.msra.mxu0 %v1309
        %1326 = vmatprep.subr.mxu0 0.0
        %1327 = vmatpush1.msra.mxu0 %v1310
        %1328 = vmatprep.subr.mxu0 0.0
        %1329 = vmatpush1.msra.mxu0 %v1311
        %1330 = vmatprep.subr.mxu0 0.0
        %1331 = vmatpush1.msra.mxu0 0.0
        %1332 = vmatprep.subr.mxu0 0.0
        %1333 = vmatpush1.msra.mxu0 0.0
        %1334 = vmatprep.subr.mxu0 0.0
        %1335 = vmatpush1.msra.mxu0 0.0
        %1336 = vmatprep.subr.mxu0 0.0
        %1337 = vmatpush1.msra.mxu0 0.0
        %1338 = vmatprep.subr.mxu0 0.0
        %1339 = vmatpush1.msra.mxu0 0.0
        %1340 = vmatprep.subr.mxu0 0.0
        %1341 = vmatpush1.msra.mxu0 0.0
        %1342 = vmatprep.subr.mxu0 0.0
        %1343 = vmatpush1.msra.mxu0 0.0
        %1344 = vmatprep.subr.mxu0 0.0
        %1345 = vmatpush1.msra.mxu0 0.0
        %1346 = vmatprep.subr.mxu0 0.0
        %1347 = vmatpush1.msra.mxu0 0.0
        %1348 = vmatprep.subr.mxu0 0.0
        %1349 = vmatpush1.msra.mxu0 0.0
        %1350 = vmatprep.subr.mxu0 0.0
        %1351 = vmatpush1.msra.mxu0 0.0
        %1352 = vmatprep.subr.mxu0 0.0
        %1353 = vmatpush1.msra.mxu0 0.0
        %1354 = vmatprep.subr.mxu0 0.0
        %1355 = vmatpush1.msra.mxu0 0.0
        %1356 = vmatprep.subr.mxu0 0.0
        %1357 = vmatpush1.msra.mxu0 0.0
        %1358 = vmatprep.subr.mxu0 0.0
        %1359 = vmatpush1.msra.mxu0 0.0
        %1360 = vmatprep.subr.mxu0 0.0
        %1361 = vmatpush1.msra.mxu0 0.0
        %1362 = vmatprep.subr.mxu0 0.0
        %1363 = vmatpush1.msra.mxu0 0.0
        %1364 = vmatprep.subr.mxu0 0.0
        %1365 = vmatpush1.msra.mxu0 0.0
        %1366 = vmatprep.subr.mxu0 0.0
        %1367 = vmatpush1.msra.mxu0 0.0
        %1368 = vmatprep.subr.mxu0 0.0
        %1369 = vmatpush1.msra.mxu0 0.0
        %1370 = vmatprep.subr.mxu0 0.0
        %1371 = vmatpush1.msra.mxu0 0.0
        %1372 = vmatprep.subr.mxu0 0.0
        %1373 = vmatpush1.msra.mxu0 0.0
        %1374 = vmatprep.subr.mxu0 0.0
        %1375 = vmatpush1.msra.mxu0 0.0
        %1376 = vmatprep.subr.mxu0 0.0
        %1377 = vmatpush1.msra.mxu0 0.0
        %1378 = vmatprep.subr.mxu0 0.0
        %1379 = vmatpush1.msra.mxu0 0.0
        %1380 = vmatprep.subr.mxu0 0.0
        %1381 = vmatpush1.msra.mxu0 0.0
        %1382 = vmatprep.subr.mxu0 0.0
        %1383 = vmatpush1.msra.mxu0 0.0
        %1384 = vmatprep.subr.mxu0 0.0
        %1385 = vmatpush1.msra.mxu0 0.0
        %1386 = vmatprep.mubr.f32.mxu0 0.0
        %1387 = vmatmul.mubr.f32.gmra.mrb[0].mxu0 %v1320
        %v1388 = vpop.f32.mrb[0].mxu0
        %v1389 = vadd.f32 %v1317, %v1388
        %v1390 = vpop.f32.mrb[0].mxu0
        %1391 = vdwg.mxu0
        %vm1392 = vcmask 64512
        %v1393 = vsel %vm1392, %v1389, -inf
        %1394 = vmax.xlane.f32.xlu0 %v1393
        %v1395 = vpop.xlane.xlu0 %1394
        %v1396 = vsub.f32 %v1389, %v1395
        %v1397 = vmul.f32 %v1396, 1.442695
        %v1398 = vpow.pop %v1397
        %v1399 = vsel %vm1392, %v1398, 0.0
        %1400 = vadd.xlane.f32.xlu0 %v1399
        %v1401 = vpop.xlane.xlu0 %1400
        %v1402 = vlog2.pop %v1401
        %v1403 = vmul.f32 %v1402, 0.6931472
        %v1404 = vsub.f32 %v1396, %v1403
        %1405 = vst.msk [vmem:[%s276] sm:$0xff] %vm1392, %v1404
        %s1406 = sand.u32 %s163, 1
        %s1407 = scalar_lea.sflag [#allocation9], %s1406
        %s1408 = sand.u32 %s163, 1
        %s1409 = smul.addr %s1408, 8
        %s1410 = scalar_lea.vmem [#allocation13], %s1409
        // Predicated region
        $region57: #{lstm_tagger_forward_batched.1} parent=43 // pred_check
          %p1411 = pneg %p173
        $region58: #{lstm_tagger_forward_batched.1} parent=43 // pred_check_branch
          %1413 = sbr.rel (%p1411) target = $region60
        $region59: #{lstm_tagger_forward_batched.1} parent=43 // pred_region
          %s1415 = ssub.s32 128, 128
          %1416 = vsyncadd %s1407, %s1415
          %s1417 = smul.addr %s29, 128
          %s1418 = scalar_lea.hbm %s7, %s1417
          %s1420 = sshll.u32 %s1410, 4
          %s1421 = int_to_ptr.vmem [resolvable:$true] %s1420
          %1423 = dma.vmem_to_hbm [thread:$0]  %s1421, 128, %s1418, %s1407
        $region60: #{lstm_tagger_forward_batched.1} parent=43 // pred_fallthru
          _
      $region44: #{lstm_tagger_forward_batched.1} parent=5 // pred_fallthru
        _
      %p1424 = scmp.le.s32.totalorder 2, %s24
      // Predicated region
      $region61: #{lstm_tagger_forward_batched.1} parent=5 // pred_check
        %p1425 = pneg %p1424
      $region62: #{lstm_tagger_forward_batched.1} parent=5 // pred_check_branch
        %1427 = sbr.rel (%p1425) target = $region64
      $region63: #{lstm_tagger_forward_batched.1} parent=5 // pred_region
        %s1428 = ssub.s32 %s24, 2
        // Predicated region
        $region65: #{lstm_tagger_forward_batched.1} parent=63 // pred_check
          %p1429 = pneg %p179
        $region66: #{lstm_tagger_forward_batched.1} parent=63 // pred_check_branch
          %1431 = sbr.rel (%p1429) target = $region68
        $region67: #{lstm_tagger_forward_batched.1} parent=63 // pred_region
          %s1432 = sand.u32 %s164, 1
          %s1433 = scalar_lea.sflag [#allocation9], %s1432
          %s1434 = sand.u32 %s164, 1
          %s1435 = smul.addr %s1434, 8
          %s1436 = scalar_lea.vmem [#allocation13], %s1435
          %1437 = dma.done %s1433, 128
        $region68: #{lstm_tagger_forward_batched.1} parent=63 // pred_fallthru
          _
      $region64: #{lstm_tagger_forward_batched.1} parent=5 // pred_fallthru
        _
    $region6: #{lstm_tagger_forward_batched.1} parent=1 // loop_footer
      %s28 = sadd.s32 1, %s24
    $region7: #{lstm_tagger_forward_batched.1} parent=1 // loop_footer_branch
      %23 = sbr.rel target = $region3
    $region8: #{lstm_tagger_forward_batched.1} parent=1 // loop_exit
      _
    %1438 = vsyncpa [#allocation8], 1
    %s1439 = scalar_lea.sflag [#allocation8], 1
    %1440 = vsyncpa %s1439, 1
    %1441 = vsyncpa [#allocation11], 1
    %1442 = vsyncpa [#allocation9], 1
    %s1443 = scalar_lea.sflag [#allocation9], 1
    %1444 = vsyncpa %s1443, 1

</llo_original>
